<compile_context>
chip_gen: v7x
topology: tpu7x:2x2x1
jax: 0.10.0
libtpu: 0.0.40
codegen_flags: <defaults>
</compile_context>

<pallas_src>
import functools

import jax
import jax.numpy as jnp
from jax.experimental import pallas as pl
from jax.experimental.pallas import tpu as pltpu

EPS = 1e-5
KSIZE = 7
TAPS = KSIZE * KSIZE

_VMEM_BUDGET = 32 * 1024 * 1024   # operand budget used when auto-picking tn
_VMEM_CAP = 48 * 1024 * 1024      # never request more than this (v7x: 64 MiB physical)


def _round_up(x, m):
    return (x + m - 1) // m * m


def _vmem_bytes(tm, tn, tk):
    """Rough double-buffered VMEM footprint of one grid step."""
    taps = TAPS * tm * tk * 2                 # bf16
    wdw = _round_up(TAPS, 8) * tk * 4         # f32
    b1 = 8 * tk * 4                           # (1, tk) padded to 8 sublanes
    wpw = tk * tn * 2                         # bf16
    b2 = 8 * tn * 4
    out = tm * tn * 4                         # f32
    acc = tm * tn * 4                         # scratch (single buffer)
    return 2 * (taps + wdw + b1 + wpw + b2 + out) + acc


def _pick_tn(cout_p, tm, tk, budget):
    """Largest Cout tile (ideally the whole padded Cout) that fits the budget."""
    tn = cout_p
    while tn > 128 and _vmem_bytes(tm, tn, tk) > budget:
        tn = _round_up((tn + 1) // 2, 128)
    return tn


# ---------------------------------------------------------------------------
# Fused Pallas kernel: depthwise conv + BN1 + ReLU + pointwise matmul + BN2 + ReLU
# Grid: (M_tiles, Cout_tiles, Cin_tiles)  — Cin (reduction) axis innermost.
# With default tiling Cout_tiles == 1, so the taps stream / depthwise work is
# never replicated across output-channel tiles.
# ---------------------------------------------------------------------------
def _dpblock_kernel(taps_ref, wdw_ref, b1_ref, wpw_ref, b2_ref, o_ref, acc_ref,
                    *, row_chunk):
    k = pl.program_id(2)

    @pl.when(k == 0)
    def _init():
        acc_ref[...] = jnp.zeros_like(acc_ref)

    tm = taps_ref.shape[1]
    w = wdw_ref[...]          # (TAPS, tk) f32, BN1 scale folded in
    b1 = b1_ref[...]          # (1, tk)   f32, BN1 bias

    # Strip-mine the rows so the f32 depthwise partial sum is a small working
    # set instead of a full-tile VMEM temp that is RMW'd 49 times.
    # TODO(synk): on v6e/v7x the tap multiplies could run in bf16 on the VPU
    # (with periodic f32 accumulation) for ~2x VALU throughput; kept f32 here
    # for accuracy and v5e portability (no bf16 VPU there).
    r = 0
    while r < tm:
        rc = min(row_chunk, tm - r)
        rows = pl.ds(r, rc)

        # ---- depthwise 7x7: 49 tap-weighted VPU FMAs, f32 accumulation ----
        dw = taps_ref[0, rows, :].astype(jnp.float32) * w[0:1, :]
        for t in range(1, TAPS):                       # static unroll, 49 taps
            dw = dw + taps_ref[t, rows, :].astype(jnp.float32) * w[t:t + 1, :]
        # BN1 bias + ReLU (scale already folded into the depthwise weights).
        dw = jnp.maximum(dw + b1, 0.0)

        # ---- pointwise 1x1: MXU matmul, bf16 operands, f32 accumulation ----
        acc_ref[rows, :] += jnp.dot(dw.astype(jnp.bfloat16), wpw_ref[...],
                                    preferred_element_type=jnp.float32)
        r += rc

    # ---- epilogue on the last Cin chunk: BN2 bias + ReLU, lane-dense store ----
    @pl.when(k == pl.num_programs(2) - 1)
    def _finalize():
        o_ref[...] = jnp.maximum(acc_ref[...] + b2_ref[...], 0.0).astype(o_ref.dtype)


# ---------------------------------------------------------------------------
# BN folding / parameter init
# ---------------------------------------------------------------------------
def fold_bn(bn):
    g, b, m, v = bn
    scale = g / jnp.sqrt(v + EPS)
    bias = b - m * scale
    return scale, bias


def init_bn(key, c):
    k1, k2, k3, k4 = jax.random.split(key, 4)
    gamma = 1.0 + 0.1 * jax.random.normal(k1, (c,), jnp.float32)
    beta = 0.1 * jax.random.normal(k2, (c,), jnp.float32)
    mean = 0.1 * jax.random.normal(k3, (c,), jnp.float32)
    var = 1.0 + 0.1 * jnp.abs(jax.random.normal(k4, (c,), jnp.float32))
    return (gamma, beta, mean, var)


def init_params(key, in_planes, out_planes):
    k1, k2, k3, k4 = jax.random.split(key, 4)
    return {
        # depthwise conv weight, PyTorch layout (in_planes, 1, 7, 7)
        "w_dw": 0.1 * jax.random.normal(k1, (in_planes, 1, KSIZE, KSIZE), jnp.float32),
        "bn1": init_bn(k2, in_planes),
        # pointwise conv weight, PyTorch layout (out_planes, in_planes, 1, 1)
        "w_pw": 0.1 * jax.random.normal(k3, (out_planes, in_planes, 1, 1), jnp.float32),
        "bn2": init_bn(k4, out_planes),
    }


# ---------------------------------------------------------------------------
# Forward pass (Pallas path)
# ---------------------------------------------------------------------------
def dpblock_forward(x_nchw, params, stride=7,
                    block_m=512, block_n=None, block_k=128, row_chunk=128):
    w_dw = params["w_dw"]
    w_pw = params["w_pw"]
    N, Cin, H, W = x_nchw.shape
    Cout = w_pw.shape[0]
    pad = 1

    Ho = (H + 2 * pad - KSIZE) // stride + 1
    Wo = (W + 2 * pad - KSIZE) // stride + 1
    M = N * Ho * Wo

    # NCHW -> NHWC (channels in the lane dim), cast to bf16 BEFORE any
    # materialization (halves wrapper HBM traffic), spatial padding=1.
    x = jnp.transpose(x_nchw.astype(jnp.bfloat16), (0, 2, 3, 1))
    xp = jnp.pad(x, ((0, 0), (pad, pad), (pad, pad), (0, 0)))

    # Tap ("im2col") extraction in bf16: (TAPS, M, Cin). At the module's
    # default stride==kernel the 49 taps are ~1x the input bytes.
    # TODO(synk): for stride < kernel, fuse tap extraction into the kernel via
    # manual DMA / Element-indexed BlockSpecs to avoid the (7/stride)^2 blow-up.
    taps = []
    for kh in range(KSIZE):
        for kw in range(KSIZE):
            t = xp[:, kh:kh + stride * Ho:stride, kw:kw + stride * Wo:stride, :]
            taps.append(t.reshape(M, Cin))
    taps = jnp.stack(taps, axis=0)

    # Fold BN scales into the weights; only the biases remain in the epilogue.
    s1, b1 = fold_bn(params["bn1"])
    s2, b2 = fold_bn(params["bn2"])
    wdw_mat = jnp.transpose(w_dw.reshape(Cin, TAPS), (1, 0)) * s1[None, :]  # (49, Cin)
    wpw_mat = w_pw.reshape(Cout, Cin).T * s2[None, :]                       # (Cin, Cout)

    # ---- tiling: lane dims padded to multiples of 128, rows to the M tile ----
    cin_p = _round_up(Cin, 128)
    cout_p = _round_up(Cout, 128)
    tk = min(_round_up(block_k, 128), cin_p)
    cin_p = _round_up(cin_p, tk)
    tm = min(_round_up(block_m, 16), _round_up(M, 16))
    m_p = _round_up(M, tm)
    if block_n is None:
        # Full-width Cout tile whenever it fits the VMEM budget, so the taps
        # tensor is streamed (and the depthwise conv computed) exactly once.
        tn = _pick_tn(cout_p, tm, tk, _VMEM_BUDGET)
    else:
        tn = min(_round_up(block_n, 128), cout_p)
    cout_p = _round_up(cout_p, tn)
    # TODO(synk): if Cout ever genuinely needs >1 N tile, cache the depthwise
    # output in a VMEM scratch during the first N sweep instead of recomputing.

    # Zero-padded operands, built directly in their kernel dtype.
    taps_p = jnp.pad(taps, ((0, 0), (0, m_p - M), (0, cin_p - Cin)))          # bf16
    wdw_p = jnp.pad(wdw_mat, ((0, 0), (0, cin_p - Cin)))                      # f32
    b1_p = jnp.pad(b1, (0, cin_p - Cin)).reshape(1, cin_p)                    # f32
    wpw_p = jnp.pad(wpw_mat, ((0, cin_p - Cin), (0, cout_p - Cout))).astype(jnp.bfloat16)
    b2_p = jnp.pad(b2, (0, cout_p - Cout)).reshape(1, cout_p)                 # f32

    grid = (m_p // tm, cout_p // tn, cin_p // tk)

    est = _vmem_bytes(tm, tn, tk)
    vmem_limit = min(est + est // 4 + (2 << 20), _VMEM_CAP)
    vmem_limit = max(vmem_limit, est + (1 << 20), 16 << 20)

    out = pl.pallas_call(
        functools.partial(_dpblock_kernel, row_chunk=row_chunk),
        out_shape=jax.ShapeDtypeStruct((m_p, cout_p), jnp.float32),
        grid=grid,
        in_specs=[
            pl.BlockSpec((TAPS, tm, tk), lambda i, j, k: (0, i, k)),
            pl.BlockSpec((TAPS, tk), lambda i, j, k: (0, k)),
            pl.BlockSpec((1, tk), lambda i, j, k: (0, k)),
            pl.BlockSpec((tk, tn), lambda i, j, k: (k, j)),
            pl.BlockSpec((1, tn), lambda i, j, k: (0, j)),
        ],
        out_specs=pl.BlockSpec((tm, tn), lambda i, j, k: (i, j)),
        scratch_shapes=[pltpu.VMEM((tm, tn), jnp.float32)],
        compiler_params=pltpu.CompilerParams(
            dimension_semantics=("parallel", "parallel", "arbitrary"),
            vmem_limit_bytes=int(vmem_limit),
        ),
    )(taps_p, wdw_p, b1_p, wpw_p, b2_p)

    out = out[:M, :Cout].reshape(N, Ho, Wo, Cout)
    return jnp.transpose(out, (0, 3, 1, 2))  # back to NCHW (module interface)


# ---------------------------------------------------------------------------
# Pure-JAX reference (lax.conv) for verification
# ---------------------------------------------------------------------------
def reference_forward(x, params, stride=7):
    def bn(t, p):
        g, b, m, v = p
        inv = g / jnp.sqrt(v + EPS)
        return t * inv[None, :, None, None] + (b - m * inv)[None, :, None, None]

    Cin = x.shape[1]
    out = jax.lax.conv_general_dilated(
        x, params["w_dw"], (stride, stride), [(1, 1), (1, 1)],
        dimension_numbers=("NCHW", "OIHW", "NCHW"),
        feature_group_count=Cin)
    out = jax.nn.relu(bn(out, params["bn1"]))
    out = jax.lax.conv_general_dilated(
        out, params["w_pw"], (1, 1), [(0, 0), (0, 0)],
        dimension_numbers=("NCHW", "OIHW", "NCHW"))
    out = jax.nn.relu(bn(out, params["bn2"]))
    return out


# ---------------------------------------------------------------------------
if __name__ == "__main__":
    key = jax.random.PRNGKey(0)
    k1, k2, k3, k4, k5, k6 = jax.random.split(key, 6)

    # Config 1: small shapes implied by the module (batch=2, channels=4,
    # spatial=16), default stride=7.
    x1 = jax.random.normal(k1, (2, 4, 16, 16), jnp.float32)
    p1 = init_params(k2, in_planes=4, out_planes=8)
    out1 = jax.block_until_ready(dpblock_forward(x1, p1, stride=7))
    ref1 = jax.block_until_ready(reference_forward(x1, p1, stride=7))
    assert out1.shape == ref1.shape == (2, 8, 2, 2)
    err1 = float(jnp.max(jnp.abs(out1 - ref1)))
    assert jnp.allclose(out1, ref1, atol=2e-2, rtol=2e-2), err1

    # Config 2: multi-step M grid (block_m=16), overlapping taps (stride=3),
    # channel padding.
    x2 = jax.random.normal(k3, (2, 8, 20, 20), jnp.float32)
    p2 = init_params(k4, in_planes=8, out_planes=16)
    out2 = jax.block_until_ready(dpblock_forward(x2, p2, stride=3, block_m=16))
    ref2 = jax.block_until_ready(reference_forward(x2, p2, stride=3))
    assert out2.shape == ref2.shape == (2, 16, 6, 6)
    err2 = float(jnp.max(jnp.abs(out2 - ref2)))
    assert jnp.allclose(out2, ref2, atol=2e-2, rtol=2e-2), err2

    # Config 3: Cin > 128 exercises the multi-step Cin reduction (innermost
    # grid axis) with the f32 accumulator init/finalize path.
    x3 = jax.random.normal(k5, (2, 160, 16, 16), jnp.float32)
    p3 = init_params(k6, in_planes=160, out_planes=32)
    out3 = jax.block_until_ready(dpblock_forward(x3, p3, stride=7))
    ref3 = jax.block_until_ready(reference_forward(x3, p3, stride=7))
    assert out3.shape == ref3.shape == (2, 32, 2, 2)
    err3 = float(jnp.max(jnp.abs(out3 - ref3)))
    assert jnp.allclose(out3, ref3, atol=3e-2, rtol=3e-2), err3

    print("KERNEL_OK")
</pallas_src>

<mosaic_0001>
module attributes {stable_mosaic.version = 11 : i64} {
  func.func @_dpblock_kernel(%arg0: i32, %arg1: i32, %arg2: i32, %arg3: memref<49x16x128xbf16, #tpu.memory_space<vmem>>, %arg4: memref<49x128xf32, #tpu.memory_space<vmem>>, %arg5: memref<1x128xf32, #tpu.memory_space<vmem>>, %arg6: memref<128x128xbf16, #tpu.memory_space<vmem>>, %arg7: memref<1x128xf32, #tpu.memory_space<vmem>>, %arg8: memref<16x128xf32, #tpu.memory_space<vmem>>, %arg9: memref<16x128xf32, #tpu.memory_space<vmem>>) attributes {dimension_semantics = [#tpu.dimension_semantics<parallel>, #tpu.dimension_semantics<parallel>, #tpu.dimension_semantics<arbitrary>], iteration_bounds = array<i64: 1, 1, 1>, scalar_prefetch = 0 : i64, scratch_operands = 1 : i64, tpu.core_type = #tpu.core_type<tc>, window_params = [{transform_indices = @transform_0, window_bounds = array<i64: 49, 16, 128>}, {transform_indices = @transform_1, window_bounds = array<i64: 49, 128>}, {transform_indices = @transform_2, window_bounds = array<i64: 1, 128>}, {transform_indices = @transform_3, window_bounds = array<i64: 128, 128>}, {transform_indices = @transform_4, window_bounds = array<i64: 1, 128>}, {transform_indices = @transform_5, window_bounds = array<i64: 16, 128>}]} {
    %c0_i32 = arith.constant 0 : i32
    %0 = arith.cmpi eq, %arg2, %c0_i32 : i32
    %1 = arith.extui %0 : i1 to i32
    %c0_i32_0 = arith.constant 0 : i32
    %2 = arith.cmpi ne, %1, %c0_i32_0 : i32
    scf.if %2 {
      %cst_112 = arith.constant 0.000000e+00 : f32
      %360 = vector.broadcast %cst_112 : f32 to vector<16x128xf32>
      %c0_113 = arith.constant 0 : index
      %c0_114 = arith.constant 0 : index
      %361 = vector.load %arg9[%c0_113, %c0_114] : memref<16x128xf32, #tpu.memory_space<vmem>>, vector<16x128xf32>
      tpu.vector_store %arg9[%c0_113, %c0_114], %360 {strides = array<i32>} : memref<16x128xf32, #tpu.memory_space<vmem>>, vector<16x128xf32>,
    } else {
    }
    %c0 = arith.constant 0 : index
    %c0_1 = arith.constant 0 : index
    %3 = vector.load %arg4[%c0, %c0_1] : memref<49x128xf32, #tpu.memory_space<vmem>>, vector<49x128xf32>
    %c0_2 = arith.constant 0 : index
    %c0_3 = arith.constant 0 : index
    %4 = vector.load %arg5[%c0_2, %c0_3] : memref<1x128xf32, #tpu.memory_space<vmem>>, vector<1x128xf32>
    %c0_4 = arith.constant 0 : index
    %c0_5 = arith.constant 0 : index
    %c0_6 = arith.constant 0 : index
    %5 = vector.load %arg3[%c0_4, %c0_5, %c0_6] : memref<49x16x128xbf16, #tpu.memory_space<vmem>>, vector<1x16x128xbf16>
    %6 = vector.shape_cast %5 : vector<1x16x128xbf16> to vector<16x128xbf16>
    %7 = arith.extf %6 : vector<16x128xbf16> to vector<16x128xf32>
    %8 = vector.extract_strided_slice %3 {offsets = [0, 0], sizes = [1, 128], strides = [1, 1]} : vector<49x128xf32> to vector<1x128xf32>
    %9 = vector.broadcast %8 : vector<1x128xf32> to vector<16x128xf32>
    %10 = arith.mulf %7, %9 : vector<16x128xf32>
    %c1 = arith.constant 1 : index
    %c0_7 = arith.constant 0 : index
    %c0_8 = arith.constant 0 : index
    %11 = vector.load %arg3[%c1, %c0_7, %c0_8] : memref<49x16x128xbf16, #tpu.memory_space<vmem>>, vector<1x16x128xbf16>
    %12 = vector.shape_cast %11 : vector<1x16x128xbf16> to vector<16x128xbf16>
    %13 = arith.extf %12 : vector<16x128xbf16> to vector<16x128xf32>
    %14 = vector.extract_strided_slice %3 {offsets = [1, 0], sizes = [1, 128], strides = [1, 1]} : vector<49x128xf32> to vector<1x128xf32>
    %15 = vector.broadcast %14 : vector<1x128xf32> to vector<16x128xf32>
    %16 = arith.mulf %13, %15 : vector<16x128xf32>
    %17 = arith.addf %10, %16 : vector<16x128xf32>
    %c2 = arith.constant 2 : index
    %c0_9 = arith.constant 0 : index
    %c0_10 = arith.constant 0 : index
    %18 = vector.load %arg3[%c2, %c0_9, %c0_10] : memref<49x16x128xbf16, #tpu.memory_space<vmem>>, vector<1x16x128xbf16>
    %19 = vector.shape_cast %18 : vector<1x16x128xbf16> to vector<16x128xbf16>
    %20 = arith.extf %19 : vector<16x128xbf16> to vector<16x128xf32>
    %21 = vector.extract_strided_slice %3 {offsets = [2, 0], sizes = [1, 128], strides = [1, 1]} : vector<49x128xf32> to vector<1x128xf32>
    %22 = vector.broadcast %21 : vector<1x128xf32> to vector<16x128xf32>
    %23 = arith.mulf %20, %22 : vector<16x128xf32>
    %24 = arith.addf %17, %23 : vector<16x128xf32>
    %c3 = arith.constant 3 : index
    %c0_11 = arith.constant 0 : index
    %c0_12 = arith.constant 0 : index
    %25 = vector.load %arg3[%c3, %c0_11, %c0_12] : memref<49x16x128xbf16, #tpu.memory_space<vmem>>, vector<1x16x128xbf16>
    %26 = vector.shape_cast %25 : vector<1x16x128xbf16> to vector<16x128xbf16>
    %27 = arith.extf %26 : vector<16x128xbf16> to vector<16x128xf32>
    %28 = vector.extract_strided_slice %3 {offsets = [3, 0], sizes = [1, 128], strides = [1, 1]} : vector<49x128xf32> to vector<1x128xf32>
    %29 = vector.broadcast %28 : vector<1x128xf32> to vector<16x128xf32>
    %30 = arith.mulf %27, %29 : vector<16x128xf32>
    %31 = arith.addf %24, %30 : vector<16x128xf32>
    %c4 = arith.constant 4 : index
    %c0_13 = arith.constant 0 : index
    %c0_14 = arith.constant 0 : index
    %32 = vector.load %arg3[%c4, %c0_13, %c0_14] : memref<49x16x128xbf16, #tpu.memory_space<vmem>>, vector<1x16x128xbf16>
    %33 = vector.shape_cast %32 : vector<1x16x128xbf16> to vector<16x128xbf16>
    %34 = arith.extf %33 : vector<16x128xbf16> to vector<16x128xf32>
    %35 = vector.extract_strided_slice %3 {offsets = [4, 0], sizes = [1, 128], strides = [1, 1]} : vector<49x128xf32> to vector<1x128xf32>
    %36 = vector.broadcast %35 : vector<1x128xf32> to vector<16x128xf32>
    %37 = arith.mulf %34, %36 : vector<16x128xf32>
    %38 = arith.addf %31, %37 : vector<16x128xf32>
    %c5 = arith.constant 5 : index
    %c0_15 = arith.constant 0 : index
    %c0_16 = arith.constant 0 : index
    %39 = vector.load %arg3[%c5, %c0_15, %c0_16] : memref<49x16x128xbf16, #tpu.memory_space<vmem>>, vector<1x16x128xbf16>
    %40 = vector.shape_cast %39 : vector<1x16x128xbf16> to vector<16x128xbf16>
    %41 = arith.extf %40 : vector<16x128xbf16> to vector<16x128xf32>
    %42 = vector.extract_strided_slice %3 {offsets = [5, 0], sizes = [1, 128], strides = [1, 1]} : vector<49x128xf32> to vector<1x128xf32>
    %43 = vector.broadcast %42 : vector<1x128xf32> to vector<16x128xf32>
    %44 = arith.mulf %41, %43 : vector<16x128xf32>
    %45 = arith.addf %38, %44 : vector<16x128xf32>
    %c6 = arith.constant 6 : index
    %c0_17 = arith.constant 0 : index
    %c0_18 = arith.constant 0 : index
    %46 = vector.load %arg3[%c6, %c0_17, %c0_18] : memref<49x16x128xbf16, #tpu.memory_space<vmem>>, vector<1x16x128xbf16>
    %47 = vector.shape_cast %46 : vector<1x16x128xbf16> to vector<16x128xbf16>
    %48 = arith.extf %47 : vector<16x128xbf16> to vector<16x128xf32>
    %49 = vector.extract_strided_slice %3 {offsets = [6, 0], sizes = [1, 128], strides = [1, 1]} : vector<49x128xf32> to vector<1x128xf32>
    %50 = vector.broadcast %49 : vector<1x128xf32> to vector<16x128xf32>
    %51 = arith.mulf %48, %50 : vector<16x128xf32>
    %52 = arith.addf %45, %51 : vector<16x128xf32>
    %c7 = arith.constant 7 : index
    %c0_19 = arith.constant 0 : index
    %c0_20 = arith.constant 0 : index
    %53 = vector.load %arg3[%c7, %c0_19, %c0_20] : memref<49x16x128xbf16, #tpu.memory_space<vmem>>, vector<1x16x128xbf16>
    %54 = vector.shape_cast %53 : vector<1x16x128xbf16> to vector<16x128xbf16>
    %55 = arith.extf %54 : vector<16x128xbf16> to vector<16x128xf32>
    %56 = vector.extract_strided_slice %3 {offsets = [7, 0], sizes = [1, 128], strides = [1, 1]} : vector<49x128xf32> to vector<1x128xf32>
    %57 = vector.broadcast %56 : vector<1x128xf32> to vector<16x128xf32>
    %58 = arith.mulf %55, %57 : vector<16x128xf32>
    %59 = arith.addf %52, %58 : vector<16x128xf32>
    %c8 = arith.constant 8 : index
    %c0_21 = arith.constant 0 : index
    %c0_22 = arith.constant 0 : index
    %60 = vector.load %arg3[%c8, %c0_21, %c0_22] : memref<49x16x128xbf16, #tpu.memory_space<vmem>>, vector<1x16x128xbf16>
    %61 = vector.shape_cast %60 : vector<1x16x128xbf16> to vector<16x128xbf16>
    %62 = arith.extf %61 : vector<16x128xbf16> to vector<16x128xf32>
    %63 = vector.extract_strided_slice %3 {offsets = [8, 0], sizes = [1, 128], strides = [1, 1]} : vector<49x128xf32> to vector<1x128xf32>
    %64 = vector.broadcast %63 : vector<1x128xf32> to vector<16x128xf32>
    %65 = arith.mulf %62, %64 : vector<16x128xf32>
    %66 = arith.addf %59, %65 : vector<16x128xf32>
    %c9 = arith.constant 9 : index
    %c0_23 = arith.constant 0 : index
    %c0_24 = arith.constant 0 : index
    %67 = vector.load %arg3[%c9, %c0_23, %c0_24] : memref<49x16x128xbf16, #tpu.memory_space<vmem>>, vector<1x16x128xbf16>
    %68 = vector.shape_cast %67 : vector<1x16x128xbf16> to vector<16x128xbf16>
    %69 = arith.extf %68 : vector<16x128xbf16> to vector<16x128xf32>
    %70 = vector.extract_strided_slice %3 {offsets = [9, 0], sizes = [1, 128], strides = [1, 1]} : vector<49x128xf32> to vector<1x128xf32>
    %71 = vector.broadcast %70 : vector<1x128xf32> to vector<16x128xf32>
    %72 = arith.mulf %69, %71 : vector<16x128xf32>
    %73 = arith.addf %66, %72 : vector<16x128xf32>
    %c10 = arith.constant 10 : index
    %c0_25 = arith.constant 0 : index
    %c0_26 = arith.constant 0 : index
    %74 = vector.load %arg3[%c10, %c0_25, %c0_26] : memref<49x16x128xbf16, #tpu.memory_space<vmem>>, vector<1x16x128xbf16>
    %75 = vector.shape_cast %74 : vector<1x16x128xbf16> to vector<16x128xbf16>
    %76 = arith.extf %75 : vector<16x128xbf16> to vector<16x128xf32>
    %77 = vector.extract_strided_slice %3 {offsets = [10, 0], sizes = [1, 128], strides = [1, 1]} : vector<49x128xf32> to vector<1x128xf32>
    %78 = vector.broadcast %77 : vector<1x128xf32> to vector<16x128xf32>
    %79 = arith.mulf %76, %78 : vector<16x128xf32>
    %80 = arith.addf %73, %79 : vector<16x128xf32>
    %c11 = arith.constant 11 : index
    %c0_27 = arith.constant 0 : index
    %c0_28 = arith.constant 0 : index
    %81 = vector.load %arg3[%c11, %c0_27, %c0_28] : memref<49x16x128xbf16, #tpu.memory_space<vmem>>, vector<1x16x128xbf16>
    %82 = vector.shape_cast %81 : vector<1x16x128xbf16> to vector<16x128xbf16>
    %83 = arith.extf %82 : vector<16x128xbf16> to vector<16x128xf32>
    %84 = vector.extract_strided_slice %3 {offsets = [11, 0], sizes = [1, 128], strides = [1, 1]} : vector<49x128xf32> to vector<1x128xf32>
    %85 = vector.broadcast %84 : vector<1x128xf32> to vector<16x128xf32>
    %86 = arith.mulf %83, %85 : vector<16x128xf32>
    %87 = arith.addf %80, %86 : vector<16x128xf32>
    %c12 = arith.constant 12 : index
    %c0_29 = arith.constant 0 : index
    %c0_30 = arith.constant 0 : index
    %88 = vector.load %arg3[%c12, %c0_29, %c0_30] : memref<49x16x128xbf16, #tpu.memory_space<vmem>>, vector<1x16x128xbf16>
    %89 = vector.shape_cast %88 : vector<1x16x128xbf16> to vector<16x128xbf16>
    %90 = arith.extf %89 : vector<16x128xbf16> to vector<16x128xf32>
    %91 = vector.extract_strided_slice %3 {offsets = [12, 0], sizes = [1, 128], strides = [1, 1]} : vector<49x128xf32> to vector<1x128xf32>
    %92 = vector.broadcast %91 : vector<1x128xf32> to vector<16x128xf32>
    %93 = arith.mulf %90, %92 : vector<16x128xf32>
    %94 = arith.addf %87, %93 : vector<16x128xf32>
    %c13 = arith.constant 13 : index
    %c0_31 = arith.constant 0 : index
    %c0_32 = arith.constant 0 : index
    %95 = vector.load %arg3[%c13, %c0_31, %c0_32] : memref<49x16x128xbf16, #tpu.memory_space<vmem>>, vector<1x16x128xbf16>
    %96 = vector.shape_cast %95 : vector<1x16x128xbf16> to vector<16x128xbf16>
    %97 = arith.extf %96 : vector<16x128xbf16> to vector<16x128xf32>
    %98 = vector.extract_strided_slice %3 {offsets = [13, 0], sizes = [1, 128], strides = [1, 1]} : vector<49x128xf32> to vector<1x128xf32>
    %99 = vector.broadcast %98 : vector<1x128xf32> to vector<16x128xf32>
    %100 = arith.mulf %97, %99 : vector<16x128xf32>
    %101 = arith.addf %94, %100 : vector<16x128xf32>
    %c14 = arith.constant 14 : index
    %c0_33 = arith.constant 0 : index
    %c0_34 = arith.constant 0 : index
    %102 = vector.load %arg3[%c14, %c0_33, %c0_34] : memref<49x16x128xbf16, #tpu.memory_space<vmem>>, vector<1x16x128xbf16>
    %103 = vector.shape_cast %102 : vector<1x16x128xbf16> to vector<16x128xbf16>
    %104 = arith.extf %103 : vector<16x128xbf16> to vector<16x128xf32>
    %105 = vector.extract_strided_slice %3 {offsets = [14, 0], sizes = [1, 128], strides = [1, 1]} : vector<49x128xf32> to vector<1x128xf32>
    %106 = vector.broadcast %105 : vector<1x128xf32> to vector<16x128xf32>
    %107 = arith.mulf %104, %106 : vector<16x128xf32>
    %108 = arith.addf %101, %107 : vector<16x128xf32>
    %c15 = arith.constant 15 : index
    %c0_35 = arith.constant 0 : index
    %c0_36 = arith.constant 0 : index
    %109 = vector.load %arg3[%c15, %c0_35, %c0_36] : memref<49x16x128xbf16, #tpu.memory_space<vmem>>, vector<1x16x128xbf16>
    %110 = vector.shape_cast %109 : vector<1x16x128xbf16> to vector<16x128xbf16>
    %111 = arith.extf %110 : vector<16x128xbf16> to vector<16x128xf32>
    %112 = vector.extract_strided_slice %3 {offsets = [15, 0], sizes = [1, 128], strides = [1, 1]} : vector<49x128xf32> to vector<1x128xf32>
    %113 = vector.broadcast %112 : vector<1x128xf32> to vector<16x128xf32>
    %114 = arith.mulf %111, %113 : vector<16x128xf32>
    %115 = arith.addf %108, %114 : vector<16x128xf32>
    %c16 = arith.constant 16 : index
    %c0_37 = arith.constant 0 : index
    %c0_38 = arith.constant 0 : index
    %116 = vector.load %arg3[%c16, %c0_37, %c0_38] : memref<49x16x128xbf16, #tpu.memory_space<vmem>>, vector<1x16x128xbf16>
    %117 = vector.shape_cast %116 : vector<1x16x128xbf16> to vector<16x128xbf16>
    %118 = arith.extf %117 : vector<16x128xbf16> to vector<16x128xf32>
    %119 = vector.extract_strided_slice %3 {offsets = [16, 0], sizes = [1, 128], strides = [1, 1]} : vector<49x128xf32> to vector<1x128xf32>
    %120 = vector.broadcast %119 : vector<1x128xf32> to vector<16x128xf32>
    %121 = arith.mulf %118, %120 : vector<16x128xf32>
    %122 = arith.addf %115, %121 : vector<16x128xf32>
    %c17 = arith.constant 17 : index
    %c0_39 = arith.constant 0 : index
    %c0_40 = arith.constant 0 : index
    %123 = vector.load %arg3[%c17, %c0_39, %c0_40] : memref<49x16x128xbf16, #tpu.memory_space<vmem>>, vector<1x16x128xbf16>
    %124 = vector.shape_cast %123 : vector<1x16x128xbf16> to vector<16x128xbf16>
    %125 = arith.extf %124 : vector<16x128xbf16> to vector<16x128xf32>
    %126 = vector.extract_strided_slice %3 {offsets = [17, 0], sizes = [1, 128], strides = [1, 1]} : vector<49x128xf32> to vector<1x128xf32>
    %127 = vector.broadcast %126 : vector<1x128xf32> to vector<16x128xf32>
    %128 = arith.mulf %125, %127 : vector<16x128xf32>
    %129 = arith.addf %122, %128 : vector<16x128xf32>
    %c18 = arith.constant 18 : index
    %c0_41 = arith.constant 0 : index
    %c0_42 = arith.constant 0 : index
    %130 = vector.load %arg3[%c18, %c0_41, %c0_42] : memref<49x16x128xbf16, #tpu.memory_space<vmem>>, vector<1x16x128xbf16>
    %131 = vector.shape_cast %130 : vector<1x16x128xbf16> to vector<16x128xbf16>
    %132 = arith.extf %131 : vector<16x128xbf16> to vector<16x128xf32>
    %133 = vector.extract_strided_slice %3 {offsets = [18, 0], sizes = [1, 128], strides = [1, 1]} : vector<49x128xf32> to vector<1x128xf32>
    %134 = vector.broadcast %133 : vector<1x128xf32> to vector<16x128xf32>
    %135 = arith.mulf %132, %134 : vector<16x128xf32>
    %136 = arith.addf %129, %135 : vector<16x128xf32>
    %c19 = arith.constant 19 : index
    %c0_43 = arith.constant 0 : index
    %c0_44 = arith.constant 0 : index
    %137 = vector.load %arg3[%c19, %c0_43, %c0_44] : memref<49x16x128xbf16, #tpu.memory_space<vmem>>, vector<1x16x128xbf16>
    %138 = vector.shape_cast %137 : vector<1x16x128xbf16> to vector<16x128xbf16>
    %139 = arith.extf %138 : vector<16x128xbf16> to vector<16x128xf32>
    %140 = vector.extract_strided_slice %3 {offsets = [19, 0], sizes = [1, 128], strides = [1, 1]} : vector<49x128xf32> to vector<1x128xf32>
    %141 = vector.broadcast %140 : vector<1x128xf32> to vector<16x128xf32>
    %142 = arith.mulf %139, %141 : vector<16x128xf32>
    %143 = arith.addf %136, %142 : vector<16x128xf32>
    %c20 = arith.constant 20 : index
    %c0_45 = arith.constant 0 : index
    %c0_46 = arith.constant 0 : index
    %144 = vector.load %arg3[%c20, %c0_45, %c0_46] : memref<49x16x128xbf16, #tpu.memory_space<vmem>>, vector<1x16x128xbf16>
    %145 = vector.shape_cast %144 : vector<1x16x128xbf16> to vector<16x128xbf16>
    %146 = arith.extf %145 : vector<16x128xbf16> to vector<16x128xf32>
    %147 = vector.extract_strided_slice %3 {offsets = [20, 0], sizes = [1, 128], strides = [1, 1]} : vector<49x128xf32> to vector<1x128xf32>
    %148 = vector.broadcast %147 : vector<1x128xf32> to vector<16x128xf32>
    %149 = arith.mulf %146, %148 : vector<16x128xf32>
    %150 = arith.addf %143, %149 : vector<16x128xf32>
    %c21 = arith.constant 21 : index
    %c0_47 = arith.constant 0 : index
    %c0_48 = arith.constant 0 : index
    %151 = vector.load %arg3[%c21, %c0_47, %c0_48] : memref<49x16x128xbf16, #tpu.memory_space<vmem>>, vector<1x16x128xbf16>
    %152 = vector.shape_cast %151 : vector<1x16x128xbf16> to vector<16x128xbf16>
    %153 = arith.extf %152 : vector<16x128xbf16> to vector<16x128xf32>
    %154 = vector.extract_strided_slice %3 {offsets = [21, 0], sizes = [1, 128], strides = [1, 1]} : vector<49x128xf32> to vector<1x128xf32>
    %155 = vector.broadcast %154 : vector<1x128xf32> to vector<16x128xf32>
    %156 = arith.mulf %153, %155 : vector<16x128xf32>
    %157 = arith.addf %150, %156 : vector<16x128xf32>
    %c22 = arith.constant 22 : index
    %c0_49 = arith.constant 0 : index
    %c0_50 = arith.constant 0 : index
    %158 = vector.load %arg3[%c22, %c0_49, %c0_50] : memref<49x16x128xbf16, #tpu.memory_space<vmem>>, vector<1x16x128xbf16>
    %159 = vector.shape_cast %158 : vector<1x16x128xbf16> to vector<16x128xbf16>
    %160 = arith.extf %159 : vector<16x128xbf16> to vector<16x128xf32>
    %161 = vector.extract_strided_slice %3 {offsets = [22, 0], sizes = [1, 128], strides = [1, 1]} : vector<49x128xf32> to vector<1x128xf32>
    %162 = vector.broadcast %161 : vector<1x128xf32> to vector<16x128xf32>
    %163 = arith.mulf %160, %162 : vector<16x128xf32>
    %164 = arith.addf %157, %163 : vector<16x128xf32>
    %c23 = arith.constant 23 : index
    %c0_51 = arith.constant 0 : index
    %c0_52 = arith.constant 0 : index
    %165 = vector.load %arg3[%c23, %c0_51, %c0_52] : memref<49x16x128xbf16, #tpu.memory_space<vmem>>, vector<1x16x128xbf16>
    %166 = vector.shape_cast %165 : vector<1x16x128xbf16> to vector<16x128xbf16>
    %167 = arith.extf %166 : vector<16x128xbf16> to vector<16x128xf32>
    %168 = vector.extract_strided_slice %3 {offsets = [23, 0], sizes = [1, 128], strides = [1, 1]} : vector<49x128xf32> to vector<1x128xf32>
    %169 = vector.broadcast %168 : vector<1x128xf32> to vector<16x128xf32>
    %170 = arith.mulf %167, %169 : vector<16x128xf32>
    %171 = arith.addf %164, %170 : vector<16x128xf32>
    %c24 = arith.constant 24 : index
    %c0_53 = arith.constant 0 : index
    %c0_54 = arith.constant 0 : index
    %172 = vector.load %arg3[%c24, %c0_53, %c0_54] : memref<49x16x128xbf16, #tpu.memory_space<vmem>>, vector<1x16x128xbf16>
    %173 = vector.shape_cast %172 : vector<1x16x128xbf16> to vector<16x128xbf16>
    %174 = arith.extf %173 : vector<16x128xbf16> to vector<16x128xf32>
    %175 = vector.extract_strided_slice %3 {offsets = [24, 0], sizes = [1, 128], strides = [1, 1]} : vector<49x128xf32> to vector<1x128xf32>
    %176 = vector.broadcast %175 : vector<1x128xf32> to vector<16x128xf32>
    %177 = arith.mulf %174, %176 : vector<16x128xf32>
    %178 = arith.addf %171, %177 : vector<16x128xf32>
    %c25 = arith.constant 25 : index
    %c0_55 = arith.constant 0 : index
    %c0_56 = arith.constant 0 : index
    %179 = vector.load %arg3[%c25, %c0_55, %c0_56] : memref<49x16x128xbf16, #tpu.memory_space<vmem>>, vector<1x16x128xbf16>
    %180 = vector.shape_cast %179 : vector<1x16x128xbf16> to vector<16x128xbf16>
    %181 = arith.extf %180 : vector<16x128xbf16> to vector<16x128xf32>
    %182 = vector.extract_strided_slice %3 {offsets = [25, 0], sizes = [1, 128], strides = [1, 1]} : vector<49x128xf32> to vector<1x128xf32>
    %183 = vector.broadcast %182 : vector<1x128xf32> to vector<16x128xf32>
    %184 = arith.mulf %181, %183 : vector<16x128xf32>
    %185 = arith.addf %178, %184 : vector<16x128xf32>
    %c26 = arith.constant 26 : index
    %c0_57 = arith.constant 0 : index
    %c0_58 = arith.constant 0 : index
    %186 = vector.load %arg3[%c26, %c0_57, %c0_58] : memref<49x16x128xbf16, #tpu.memory_space<vmem>>, vector<1x16x128xbf16>
    %187 = vector.shape_cast %186 : vector<1x16x128xbf16> to vector<16x128xbf16>
    %188 = arith.extf %187 : vector<16x128xbf16> to vector<16x128xf32>
    %189 = vector.extract_strided_slice %3 {offsets = [26, 0], sizes = [1, 128], strides = [1, 1]} : vector<49x128xf32> to vector<1x128xf32>
    %190 = vector.broadcast %189 : vector<1x128xf32> to vector<16x128xf32>
    %191 = arith.mulf %188, %190 : vector<16x128xf32>
    %192 = arith.addf %185, %191 : vector<16x128xf32>
    %c27 = arith.constant 27 : index
    %c0_59 = arith.constant 0 : index
    %c0_60 = arith.constant 0 : index
    %193 = vector.load %arg3[%c27, %c0_59, %c0_60] : memref<49x16x128xbf16, #tpu.memory_space<vmem>>, vector<1x16x128xbf16>
    %194 = vector.shape_cast %193 : vector<1x16x128xbf16> to vector<16x128xbf16>
    %195 = arith.extf %194 : vector<16x128xbf16> to vector<16x128xf32>
    %196 = vector.extract_strided_slice %3 {offsets = [27, 0], sizes = [1, 128], strides = [1, 1]} : vector<49x128xf32> to vector<1x128xf32>
    %197 = vector.broadcast %196 : vector<1x128xf32> to vector<16x128xf32>
    %198 = arith.mulf %195, %197 : vector<16x128xf32>
    %199 = arith.addf %192, %198 : vector<16x128xf32>
    %c28 = arith.constant 28 : index
    %c0_61 = arith.constant 0 : index
    %c0_62 = arith.constant 0 : index
    %200 = vector.load %arg3[%c28, %c0_61, %c0_62] : memref<49x16x128xbf16, #tpu.memory_space<vmem>>, vector<1x16x128xbf16>
    %201 = vector.shape_cast %200 : vector<1x16x128xbf16> to vector<16x128xbf16>
    %202 = arith.extf %201 : vector<16x128xbf16> to vector<16x128xf32>
    %203 = vector.extract_strided_slice %3 {offsets = [28, 0], sizes = [1, 128], strides = [1, 1]} : vector<49x128xf32> to vector<1x128xf32>
    %204 = vector.broadcast %203 : vector<1x128xf32> to vector<16x128xf32>
    %205 = arith.mulf %202, %204 : vector<16x128xf32>
    %206 = arith.addf %199, %205 : vector<16x128xf32>
    %c29 = arith.constant 29 : index
    %c0_63 = arith.constant 0 : index
    %c0_64 = arith.constant 0 : index
    %207 = vector.load %arg3[%c29, %c0_63, %c0_64] : memref<49x16x128xbf16, #tpu.memory_space<vmem>>, vector<1x16x128xbf16>
    %208 = vector.shape_cast %207 : vector<1x16x128xbf16> to vector<16x128xbf16>
    %209 = arith.extf %208 : vector<16x128xbf16> to vector<16x128xf32>
    %210 = vector.extract_strided_slice %3 {offsets = [29, 0], sizes = [1, 128], strides = [1, 1]} : vector<49x128xf32> to vector<1x128xf32>
    %211 = vector.broadcast %210 : vector<1x128xf32> to vector<16x128xf32>
    %212 = arith.mulf %209, %211 : vector<16x128xf32>
    %213 = arith.addf %206, %212 : vector<16x128xf32>
    %c30 = arith.constant 30 : index
    %c0_65 = arith.constant 0 : index
    %c0_66 = arith.constant 0 : index
    %214 = vector.load %arg3[%c30, %c0_65, %c0_66] : memref<49x16x128xbf16, #tpu.memory_space<vmem>>, vector<1x16x128xbf16>
    %215 = vector.shape_cast %214 : vector<1x16x128xbf16> to vector<16x128xbf16>
    %216 = arith.extf %215 : vector<16x128xbf16> to vector<16x128xf32>
    %217 = vector.extract_strided_slice %3 {offsets = [30, 0], sizes = [1, 128], strides = [1, 1]} : vector<49x128xf32> to vector<1x128xf32>
    %218 = vector.broadcast %217 : vector<1x128xf32> to vector<16x128xf32>
    %219 = arith.mulf %216, %218 : vector<16x128xf32>
    %220 = arith.addf %213, %219 : vector<16x128xf32>
    %c31 = arith.constant 31 : index
    %c0_67 = arith.constant 0 : index
    %c0_68 = arith.constant 0 : index
    %221 = vector.load %arg3[%c31, %c0_67, %c0_68] : memref<49x16x128xbf16, #tpu.memory_space<vmem>>, vector<1x16x128xbf16>
    %222 = vector.shape_cast %221 : vector<1x16x128xbf16> to vector<16x128xbf16>
    %223 = arith.extf %222 : vector<16x128xbf16> to vector<16x128xf32>
    %224 = vector.extract_strided_slice %3 {offsets = [31, 0], sizes = [1, 128], strides = [1, 1]} : vector<49x128xf32> to vector<1x128xf32>
    %225 = vector.broadcast %224 : vector<1x128xf32> to vector<16x128xf32>
    %226 = arith.mulf %223, %225 : vector<16x128xf32>
    %227 = arith.addf %220, %226 : vector<16x128xf32>
    %c32 = arith.constant 32 : index
    %c0_69 = arith.constant 0 : index
    %c0_70 = arith.constant 0 : index
    %228 = vector.load %arg3[%c32, %c0_69, %c0_70] : memref<49x16x128xbf16, #tpu.memory_space<vmem>>, vector<1x16x128xbf16>
    %229 = vector.shape_cast %228 : vector<1x16x128xbf16> to vector<16x128xbf16>
    %230 = arith.extf %229 : vector<16x128xbf16> to vector<16x128xf32>
    %231 = vector.extract_strided_slice %3 {offsets = [32, 0], sizes = [1, 128], strides = [1, 1]} : vector<49x128xf32> to vector<1x128xf32>
    %232 = vector.broadcast %231 : vector<1x128xf32> to vector<16x128xf32>
    %233 = arith.mulf %230, %232 : vector<16x128xf32>
    %234 = arith.addf %227, %233 : vector<16x128xf32>
    %c33 = arith.constant 33 : index
    %c0_71 = arith.constant 0 : index
    %c0_72 = arith.constant 0 : index
    %235 = vector.load %arg3[%c33, %c0_71, %c0_72] : memref<49x16x128xbf16, #tpu.memory_space<vmem>>, vector<1x16x128xbf16>
    %236 = vector.shape_cast %235 : vector<1x16x128xbf16> to vector<16x128xbf16>
    %237 = arith.extf %236 : vector<16x128xbf16> to vector<16x128xf32>
    %238 = vector.extract_strided_slice %3 {offsets = [33, 0], sizes = [1, 128], strides = [1, 1]} : vector<49x128xf32> to vector<1x128xf32>
    %239 = vector.broadcast %238 : vector<1x128xf32> to vector<16x128xf32>
    %240 = arith.mulf %237, %239 : vector<16x128xf32>
    %241 = arith.addf %234, %240 : vector<16x128xf32>
    %c34 = arith.constant 34 : index
    %c0_73 = arith.constant 0 : index
    %c0_74 = arith.constant 0 : index
    %242 = vector.load %arg3[%c34, %c0_73, %c0_74] : memref<49x16x128xbf16, #tpu.memory_space<vmem>>, vector<1x16x128xbf16>
    %243 = vector.shape_cast %242 : vector<1x16x128xbf16> to vector<16x128xbf16>
    %244 = arith.extf %243 : vector<16x128xbf16> to vector<16x128xf32>
    %245 = vector.extract_strided_slice %3 {offsets = [34, 0], sizes = [1, 128], strides = [1, 1]} : vector<49x128xf32> to vector<1x128xf32>
    %246 = vector.broadcast %245 : vector<1x128xf32> to vector<16x128xf32>
    %247 = arith.mulf %244, %246 : vector<16x128xf32>
    %248 = arith.addf %241, %247 : vector<16x128xf32>
    %c35 = arith.constant 35 : index
    %c0_75 = arith.constant 0 : index
    %c0_76 = arith.constant 0 : index
    %249 = vector.load %arg3[%c35, %c0_75, %c0_76] : memref<49x16x128xbf16, #tpu.memory_space<vmem>>, vector<1x16x128xbf16>
    %250 = vector.shape_cast %249 : vector<1x16x128xbf16> to vector<16x128xbf16>
    %251 = arith.extf %250 : vector<16x128xbf16> to vector<16x128xf32>
    %252 = vector.extract_strided_slice %3 {offsets = [35, 0], sizes = [1, 128], strides = [1, 1]} : vector<49x128xf32> to vector<1x128xf32>
    %253 = vector.broadcast %252 : vector<1x128xf32> to vector<16x128xf32>
    %254 = arith.mulf %251, %253 : vector<16x128xf32>
    %255 = arith.addf %248, %254 : vector<16x128xf32>
    %c36 = arith.constant 36 : index
    %c0_77 = arith.constant 0 : index
    %c0_78 = arith.constant 0 : index
    %256 = vector.load %arg3[%c36, %c0_77, %c0_78] : memref<49x16x128xbf16, #tpu.memory_space<vmem>>, vector<1x16x128xbf16>
    %257 = vector.shape_cast %256 : vector<1x16x128xbf16> to vector<16x128xbf16>
    %258 = arith.extf %257 : vector<16x128xbf16> to vector<16x128xf32>
    %259 = vector.extract_strided_slice %3 {offsets = [36, 0], sizes = [1, 128], strides = [1, 1]} : vector<49x128xf32> to vector<1x128xf32>
    %260 = vector.broadcast %259 : vector<1x128xf32> to vector<16x128xf32>
    %261 = arith.mulf %258, %260 : vector<16x128xf32>
    %262 = arith.addf %255, %261 : vector<16x128xf32>
    %c37 = arith.constant 37 : index
    %c0_79 = arith.constant 0 : index
    %c0_80 = arith.constant 0 : index
    %263 = vector.load %arg3[%c37, %c0_79, %c0_80] : memref<49x16x128xbf16, #tpu.memory_space<vmem>>, vector<1x16x128xbf16>
    %264 = vector.shape_cast %263 : vector<1x16x128xbf16> to vector<16x128xbf16>
    %265 = arith.extf %264 : vector<16x128xbf16> to vector<16x128xf32>
    %266 = vector.extract_strided_slice %3 {offsets = [37, 0], sizes = [1, 128], strides = [1, 1]} : vector<49x128xf32> to vector<1x128xf32>
    %267 = vector.broadcast %266 : vector<1x128xf32> to vector<16x128xf32>
    %268 = arith.mulf %265, %267 : vector<16x128xf32>
    %269 = arith.addf %262, %268 : vector<16x128xf32>
    %c38 = arith.constant 38 : index
    %c0_81 = arith.constant 0 : index
    %c0_82 = arith.constant 0 : index
    %270 = vector.load %arg3[%c38, %c0_81, %c0_82] : memref<49x16x128xbf16, #tpu.memory_space<vmem>>, vector<1x16x128xbf16>
    %271 = vector.shape_cast %270 : vector<1x16x128xbf16> to vector<16x128xbf16>
    %272 = arith.extf %271 : vector<16x128xbf16> to vector<16x128xf32>
    %273 = vector.extract_strided_slice %3 {offsets = [38, 0], sizes = [1, 128], strides = [1, 1]} : vector<49x128xf32> to vector<1x128xf32>
    %274 = vector.broadcast %273 : vector<1x128xf32> to vector<16x128xf32>
    %275 = arith.mulf %272, %274 : vector<16x128xf32>
    %276 = arith.addf %269, %275 : vector<16x128xf32>
    %c39 = arith.constant 39 : index
    %c0_83 = arith.constant 0 : index
    %c0_84 = arith.constant 0 : index
    %277 = vector.load %arg3[%c39, %c0_83, %c0_84] : memref<49x16x128xbf16, #tpu.memory_space<vmem>>, vector<1x16x128xbf16>
    %278 = vector.shape_cast %277 : vector<1x16x128xbf16> to vector<16x128xbf16>
    %279 = arith.extf %278 : vector<16x128xbf16> to vector<16x128xf32>
    %280 = vector.extract_strided_slice %3 {offsets = [39, 0], sizes = [1, 128], strides = [1, 1]} : vector<49x128xf32> to vector<1x128xf32>
    %281 = vector.broadcast %280 : vector<1x128xf32> to vector<16x128xf32>
    %282 = arith.mulf %279, %281 : vector<16x128xf32>
    %283 = arith.addf %276, %282 : vector<16x128xf32>
    %c40 = arith.constant 40 : index
    %c0_85 = arith.constant 0 : index
    %c0_86 = arith.constant 0 : index
    %284 = vector.load %arg3[%c40, %c0_85, %c0_86] : memref<49x16x128xbf16, #tpu.memory_space<vmem>>, vector<1x16x128xbf16>
    %285 = vector.shape_cast %284 : vector<1x16x128xbf16> to vector<16x128xbf16>
    %286 = arith.extf %285 : vector<16x128xbf16> to vector<16x128xf32>
    %287 = vector.extract_strided_slice %3 {offsets = [40, 0], sizes = [1, 128], strides = [1, 1]} : vector<49x128xf32> to vector<1x128xf32>
    %288 = vector.broadcast %287 : vector<1x128xf32> to vector<16x128xf32>
    %289 = arith.mulf %286, %288 : vector<16x128xf32>
    %290 = arith.addf %283, %289 : vector<16x128xf32>
    %c41 = arith.constant 41 : index
    %c0_87 = arith.constant 0 : index
    %c0_88 = arith.constant 0 : index
    %291 = vector.load %arg3[%c41, %c0_87, %c0_88] : memref<49x16x128xbf16, #tpu.memory_space<vmem>>, vector<1x16x128xbf16>
    %292 = vector.shape_cast %291 : vector<1x16x128xbf16> to vector<16x128xbf16>
    %293 = arith.extf %292 : vector<16x128xbf16> to vector<16x128xf32>
    %294 = vector.extract_strided_slice %3 {offsets = [41, 0], sizes = [1, 128], strides = [1, 1]} : vector<49x128xf32> to vector<1x128xf32>
    %295 = vector.broadcast %294 : vector<1x128xf32> to vector<16x128xf32>
    %296 = arith.mulf %293, %295 : vector<16x128xf32>
    %297 = arith.addf %290, %296 : vector<16x128xf32>
    %c42 = arith.constant 42 : index
    %c0_89 = arith.constant 0 : index
    %c0_90 = arith.constant 0 : index
    %298 = vector.load %arg3[%c42, %c0_89, %c0_90] : memref<49x16x128xbf16, #tpu.memory_space<vmem>>, vector<1x16x128xbf16>
    %299 = vector.shape_cast %298 : vector<1x16x128xbf16> to vector<16x128xbf16>
    %300 = arith.extf %299 : vector<16x128xbf16> to vector<16x128xf32>
    %301 = vector.extract_strided_slice %3 {offsets = [42, 0], sizes = [1, 128], strides = [1, 1]} : vector<49x128xf32> to vector<1x128xf32>
    %302 = vector.broadcast %301 : vector<1x128xf32> to vector<16x128xf32>
    %303 = arith.mulf %300, %302 : vector<16x128xf32>
    %304 = arith.addf %297, %303 : vector<16x128xf32>
    %c43 = arith.constant 43 : index
    %c0_91 = arith.constant 0 : index
    %c0_92 = arith.constant 0 : index
    %305 = vector.load %arg3[%c43, %c0_91, %c0_92] : memref<49x16x128xbf16, #tpu.memory_space<vmem>>, vector<1x16x128xbf16>
    %306 = vector.shape_cast %305 : vector<1x16x128xbf16> to vector<16x128xbf16>
    %307 = arith.extf %306 : vector<16x128xbf16> to vector<16x128xf32>
    %308 = vector.extract_strided_slice %3 {offsets = [43, 0], sizes = [1, 128], strides = [1, 1]} : vector<49x128xf32> to vector<1x128xf32>
    %309 = vector.broadcast %308 : vector<1x128xf32> to vector<16x128xf32>
    %310 = arith.mulf %307, %309 : vector<16x128xf32>
    %311 = arith.addf %304, %310 : vector<16x128xf32>
    %c44 = arith.constant 44 : index
    %c0_93 = arith.constant 0 : index
    %c0_94 = arith.constant 0 : index
    %312 = vector.load %arg3[%c44, %c0_93, %c0_94] : memref<49x16x128xbf16, #tpu.memory_space<vmem>>, vector<1x16x128xbf16>
    %313 = vector.shape_cast %312 : vector<1x16x128xbf16> to vector<16x128xbf16>
    %314 = arith.extf %313 : vector<16x128xbf16> to vector<16x128xf32>
    %315 = vector.extract_strided_slice %3 {offsets = [44, 0], sizes = [1, 128], strides = [1, 1]} : vector<49x128xf32> to vector<1x128xf32>
    %316 = vector.broadcast %315 : vector<1x128xf32> to vector<16x128xf32>
    %317 = arith.mulf %314, %316 : vector<16x128xf32>
    %318 = arith.addf %311, %317 : vector<16x128xf32>
    %c45 = arith.constant 45 : index
    %c0_95 = arith.constant 0 : index
    %c0_96 = arith.constant 0 : index
    %319 = vector.load %arg3[%c45, %c0_95, %c0_96] : memref<49x16x128xbf16, #tpu.memory_space<vmem>>, vector<1x16x128xbf16>
    %320 = vector.shape_cast %319 : vector<1x16x128xbf16> to vector<16x128xbf16>
    %321 = arith.extf %320 : vector<16x128xbf16> to vector<16x128xf32>
    %322 = vector.extract_strided_slice %3 {offsets = [45, 0], sizes = [1, 128], strides = [1, 1]} : vector<49x128xf32> to vector<1x128xf32>
    %323 = vector.broadcast %322 : vector<1x128xf32> to vector<16x128xf32>
    %324 = arith.mulf %321, %323 : vector<16x128xf32>
    %325 = arith.addf %318, %324 : vector<16x128xf32>
    %c46 = arith.constant 46 : index
    %c0_97 = arith.constant 0 : index
    %c0_98 = arith.constant 0 : index
    %326 = vector.load %arg3[%c46, %c0_97, %c0_98] : memref<49x16x128xbf16, #tpu.memory_space<vmem>>, vector<1x16x128xbf16>
    %327 = vector.shape_cast %326 : vector<1x16x128xbf16> to vector<16x128xbf16>
    %328 = arith.extf %327 : vector<16x128xbf16> to vector<16x128xf32>
    %329 = vector.extract_strided_slice %3 {offsets = [46, 0], sizes = [1, 128], strides = [1, 1]} : vector<49x128xf32> to vector<1x128xf32>
    %330 = vector.broadcast %329 : vector<1x128xf32> to vector<16x128xf32>
    %331 = arith.mulf %328, %330 : vector<16x128xf32>
    %332 = arith.addf %325, %331 : vector<16x128xf32>
    %c47 = arith.constant 47 : index
    %c0_99 = arith.constant 0 : index
    %c0_100 = arith.constant 0 : index
    %333 = vector.load %arg3[%c47, %c0_99, %c0_100] : memref<49x16x128xbf16, #tpu.memory_space<vmem>>, vector<1x16x128xbf16>
    %334 = vector.shape_cast %333 : vector<1x16x128xbf16> to vector<16x128xbf16>
    %335 = arith.extf %334 : vector<16x128xbf16> to vector<16x128xf32>
    %336 = vector.extract_strided_slice %3 {offsets = [47, 0], sizes = [1, 128], strides = [1, 1]} : vector<49x128xf32> to vector<1x128xf32>
    %337 = vector.broadcast %336 : vector<1x128xf32> to vector<16x128xf32>
    %338 = arith.mulf %335, %337 : vector<16x128xf32>
    %339 = arith.addf %332, %338 : vector<16x128xf32>
    %c48 = arith.constant 48 : index
    %c0_101 = arith.constant 0 : index
    %c0_102 = arith.constant 0 : index
    %340 = vector.load %arg3[%c48, %c0_101, %c0_102] : memref<49x16x128xbf16, #tpu.memory_space<vmem>>, vector<1x16x128xbf16>
    %341 = vector.shape_cast %340 : vector<1x16x128xbf16> to vector<16x128xbf16>
    %342 = arith.extf %341 : vector<16x128xbf16> to vector<16x128xf32>
    %343 = vector.extract_strided_slice %3 {offsets = [48, 0], sizes = [1, 128], strides = [1, 1]} : vector<49x128xf32> to vector<1x128xf32>
    %344 = vector.broadcast %343 : vector<1x128xf32> to vector<16x128xf32>
    %345 = arith.mulf %342, %344 : vector<16x128xf32>
    %346 = arith.addf %339, %345 : vector<16x128xf32>
    %347 = vector.broadcast %4 : vector<1x128xf32> to vector<16x128xf32>
    %348 = arith.addf %346, %347 : vector<16x128xf32>
    %cst = arith.constant 0.000000e+00 : f32
    %349 = vector.broadcast %cst : f32 to vector<16x128xf32>
    %350 = arith.maximumf %348, %349 : vector<16x128xf32>
    %c0_103 = arith.constant 0 : index
    %c0_104 = arith.constant 0 : index
    %351 = vector.load %arg9[%c0_103, %c0_104] : memref<16x128xf32, #tpu.memory_space<vmem>>, vector<16x128xf32>
    %352 = arith.truncf %350 : vector<16x128xf32> to vector<16x128xbf16>
    %c0_105 = arith.constant 0 : index
    %c0_106 = arith.constant 0 : index
    %353 = vector.load %arg6[%c0_105, %c0_106] : memref<128x128xbf16, #tpu.memory_space<vmem>>, vector<128x128xbf16>
    %cst_107 = arith.constant dense<0.000000e+00> : vector<16x128xf32>
    %354 = tpu.matmul %352, %353, %cst_107 {dimension_numbers = #tpu.dot_dimension_numbers<[1], [0], [0], [1], [0, 0, 1, 1], [], []>} : vector<16x128xbf16>, vector<128x128xbf16>, vector<16x128xf32> -> vector<16x128xf32>
    %355 = arith.addf %351, %354 : vector<16x128xf32>
    %c0_108 = arith.constant 0 : index
    %c0_109 = arith.constant 0 : index
    %356 = vector.load %arg9[%c0_108, %c0_109] : memref<16x128xf32, #tpu.memory_space<vmem>>, vector<16x128xf32>
    tpu.vector_store %arg9[%c0_108, %c0_109], %355 {strides = array<i32>} : memref<16x128xf32, #tpu.memory_space<vmem>>, vector<16x128xf32>,
    %c0_i32_110 = arith.constant 0 : i32
    %357 = arith.cmpi eq, %arg2, %c0_i32_110 : i32
    %358 = arith.extui %357 : i1 to i32
    %c0_i32_111 = arith.constant 0 : i32
    %359 = arith.cmpi ne, %358, %c0_i32_111 : i32
    scf.if %359 {
      %c0_112 = arith.constant 0 : index
      %c0_113 = arith.constant 0 : index
      %360 = vector.load %arg9[%c0_112, %c0_113] : memref<16x128xf32, #tpu.memory_space<vmem>>, vector<16x128xf32>
      %c0_114 = arith.constant 0 : index
      %c0_115 = arith.constant 0 : index
      %361 = vector.load %arg7[%c0_114, %c0_115] : memref<1x128xf32, #tpu.memory_space<vmem>>, vector<1x128xf32>
      %362 = vector.broadcast %361 : vector<1x128xf32> to vector<16x128xf32>
      %363 = arith.addf %360, %362 : vector<16x128xf32>
      %cst_116 = arith.constant 0.000000e+00 : f32
      %364 = vector.broadcast %cst_116 : f32 to vector<16x128xf32>
      %365 = arith.maximumf %363, %364 : vector<16x128xf32>
      %c0_117 = arith.constant 0 : index
      %c0_118 = arith.constant 0 : index
      %366 = vector.load %arg8[%c0_117, %c0_118] : memref<16x128xf32, #tpu.memory_space<vmem>>, vector<16x128xf32>
      tpu.vector_store %arg8[%c0_117, %c0_118], %365 {strides = array<i32>} : memref<16x128xf32, #tpu.memory_space<vmem>>, vector<16x128xf32>,
    } else {
    }
    return
  }
  func.func @transform_0(%arg0: i32, %arg1: i32, %arg2: i32) -> (i32, i32, i32) {
    %c0_i32 = arith.constant 0 : i32
    %c0_i32_0 = arith.constant 0 : i32
    return %c0_i32, %arg0, %arg2 : i32, i32, i32
  }
  func.func @transform_1(%arg0: i32, %arg1: i32, %arg2: i32) -> (i32, i32) {
    %c0_i32 = arith.constant 0 : i32
    %c0_i32_0 = arith.constant 0 : i32
    return %c0_i32, %arg2 : i32, i32
  }
  func.func @transform_2(%arg0: i32, %arg1: i32, %arg2: i32) -> (i32, i32) {
    %c0_i32 = arith.constant 0 : i32
    %c0_i32_0 = arith.constant 0 : i32
    return %c0_i32, %arg2 : i32, i32
  }
  func.func @transform_3(%arg0: i32, %arg1: i32, %arg2: i32) -> (i32, i32) {
    %c0_i32 = arith.constant 0 : i32
    return %arg2, %arg1 : i32, i32
  }
  func.func @transform_4(%arg0: i32, %arg1: i32, %arg2: i32) -> (i32, i32) {
    %c0_i32 = arith.constant 0 : i32
    %c0_i32_0 = arith.constant 0 : i32
    return %c0_i32, %arg1 : i32, i32
  }
  func.func @transform_5(%arg0: i32, %arg1: i32, %arg2: i32) -> (i32, i32) {
    %c0_i32 = arith.constant 0 : i32
    return %arg0, %arg1 : i32, i32
  }
}

</mosaic_0001>

<llo_original>
// kernel: tpu_custom_call.1
$region0: #{tpu_custom_call.1}
  #allocation0 [shape = 'u32[]', space=smem, size = 0x4, offset = 0x4, fixed_abs, tag = 'smem constant byte address 0x4 - core index']
  #allocation1 [shape = 'u32[144,128]{1,0:T(1,128)}', space=vmem, size = 0x12000, scoped, tag = 'internal scratch']
  #allocation2 [shape = 'f32[16,128]{1,0:T(8,128)}', space=vmem, size = 0x2000, scoped, tag = 'scratch operand']
  %s0 = inlined_call_operand.hbm [shape: bf16[49,16,128], index: 0, kind: input, shape index: {}]
  %s1 = inlined_call_operand.hbm [shape: f32[49,128], index: 1, kind: input, shape index: {}]
  %s2 = inlined_call_operand.vmem [shape: f32[1,128], index: 2, kind: input, shape index: {}]
  %s3 = inlined_call_operand.hbm [shape: bf16[128,128], index: 3, kind: input, shape index: {}]
  %s4 = inlined_call_operand.vmem [shape: f32[1,128], index: 4, kind: input, shape index: {}]
  %s5 = inlined_call_operand.hbm [shape: f32[16,128], index: 5, kind: output, shape index: {}]
  %s6 = sld [smem:[#allocation0]]
  $region50: #{tpu_custom_call.1} parent=0
    _
  %s8 = ssub.s32 1, %s6
  %s9 = scalar_select 0, %s8, %s6
  $region1: #{tpu_custom_call.1} parent=0
    #allocation3 [shape = 'u8[200704]{0}', space=vmem, size = 0x31000, scoped, tag = 'input window, operand 0, single buffered']
    #allocation4 [shape = 's32[1]{0}', space=sflag, size = 0x4, scoped, tag = 'scoped memory for tpu_custom_call.1']
    #allocation5 [shape = 's32[1]{0}', space=sflag, size = 0x4, scoped, tag = 'scoped memory for tpu_custom_call.1']
    #allocation6 [shape = 'u8[28672]{0}', space=vmem, size = 0x7000, scoped, tag = 'input window, operand 1, single buffered']
    #allocation7 [shape = 's32[1]{0}', space=sflag, size = 0x4, scoped, tag = 'scoped memory for tpu_custom_call.1']
    #allocation8 [shape = 'u8[32768]{0}', space=vmem, size = 0x8000, scoped, tag = 'input window, operand 3, single buffered']
    #allocation9 [shape = 'u8[8192]{0}', space=vmem, size = 0x2000, scoped, tag = 'output window, operand 0, single buffered']
    %10 = vsyncpa [#allocation4], 0
    %11 = vsyncpa [#allocation7], 0
    %12 = vsyncpa [#allocation5], 0
    // Predicated region
    $region2: #{tpu_custom_call.1} parent=1 // pred_check
      _
    $region3: #{tpu_custom_call.1} parent=1 // pred_check_branch
      %14 = sbr.rel (0) target = $region5
    $region4: #{tpu_custom_call.1} parent=1 // pred_region
      %s16 = ssub.s32 6272, 6272
      %17 = vsyncadd [#allocation4], %s16
      %s18 = sshll.u32 [#allocation3], 4
      %s19 = int_to_ptr.vmem [resolvable:$true] %s18
      %24 = dma.hbm_to_vmem [thread:$0]  %s0, 6272, %s19, [#allocation4], 64, 64, 4
    $region5: #{tpu_custom_call.1} parent=1 // pred_fallthru
      _
    // Predicated region
    $region6: #{tpu_custom_call.1} parent=1 // pred_check
      _
    $region7: #{tpu_custom_call.1} parent=1 // pred_check_branch
      %26 = sbr.rel (0) target = $region9
    $region8: #{tpu_custom_call.1} parent=1 // pred_region
      %s28 = ssub.s32 896, 896
      %29 = vsyncadd [#allocation7], %s28
      %s30 = sshll.u32 [#allocation6], 4
      %s31 = int_to_ptr.vmem [resolvable:$true] %s30
      %36 = dma.hbm_to_vmem [thread:$0]  %s1, 896, %s31, [#allocation7], 128, 128, 8
    $region9: #{tpu_custom_call.1} parent=1 // pred_fallthru
      _
    // Predicated region
    $region10: #{tpu_custom_call.1} parent=1 // pred_check
      _
    $region11: #{tpu_custom_call.1} parent=1 // pred_check_branch
      %38 = sbr.rel (0) target = $region13
    $region12: #{tpu_custom_call.1} parent=1 // pred_region
      _
    $region13: #{tpu_custom_call.1} parent=1 // pred_fallthru
      _
    // Predicated region
    $region14: #{tpu_custom_call.1} parent=1 // pred_check
      _
    $region15: #{tpu_custom_call.1} parent=1 // pred_check_branch
      %40 = sbr.rel (0) target = $region17
    $region16: #{tpu_custom_call.1} parent=1 // pred_region
      %s42 = ssub.s32 1024, 1024
      %43 = vsyncadd [#allocation7], %s42
      %s44 = sshll.u32 [#allocation8], 4
      %s45 = int_to_ptr.vmem [resolvable:$true] %s44
      %50 = dma.hbm_to_vmem [thread:$0]  %s3, 1024, %s45, [#allocation7], 64, 64, 4
    $region17: #{tpu_custom_call.1} parent=1 // pred_fallthru
      _
    // Predicated region
    $region18: #{tpu_custom_call.1} parent=1 // pred_check
      _
    $region19: #{tpu_custom_call.1} parent=1 // pred_check_branch
      %52 = sbr.rel (0) target = $region21
    $region20: #{tpu_custom_call.1} parent=1 // pred_region
      _
    $region21: #{tpu_custom_call.1} parent=1 // pred_fallthru
      _
    // Predicated region
    $region22: #{tpu_custom_call.1} parent=1 // pred_check
      _
    $region23: #{tpu_custom_call.1} parent=1 // pred_check_branch
      %54 = sbr.rel (0) target = $region25
    $region24: #{tpu_custom_call.1} parent=1 // pred_region
      %55 = dma.done [#allocation4], 6272
    $region25: #{tpu_custom_call.1} parent=1 // pred_fallthru
      _
    // Predicated region
    $region26: #{tpu_custom_call.1} parent=1 // pred_check
      _
    $region27: #{tpu_custom_call.1} parent=1 // pred_check_branch
      %57 = sbr.rel (0) target = $region29
    $region28: #{tpu_custom_call.1} parent=1 // pred_region
      %58 = dma.done [#allocation7], 896
    $region29: #{tpu_custom_call.1} parent=1 // pred_fallthru
      _
    // Predicated region
    $region30: #{tpu_custom_call.1} parent=1 // pred_check
      _
    $region31: #{tpu_custom_call.1} parent=1 // pred_check_branch
      %60 = sbr.rel (0) target = $region33
    $region32: #{tpu_custom_call.1} parent=1 // pred_region
      %61 = dma.done [#allocation7], 1024
    $region33: #{tpu_custom_call.1} parent=1 // pred_fallthru
      _
    %p63 = scmp.eq.s32.totalorder 0, 0
    // Predicated region
    $region34: #{tpu_custom_call.1} parent=1 // pred_check
      %p64 = pneg %p63
    $region35: #{tpu_custom_call.1} parent=1 // pred_check_branch
      %66 = sbr.rel (%p64) target = $region37
    $region36: #{tpu_custom_call.1} parent=1 // pred_region
      %67 = vst [vmem:[#allocation2] sm:$0xff] 0.0
      %68 = vst [vmem:[#allocation2 + $0x8] sm:$0xff] 0.0
    $region37: #{tpu_custom_call.1} parent=1 // pred_fallthru
      _
    %v69 = vld [vmem:[#allocation6] sm:$0xff]
    %v70 = vld [vmem:[#allocation6 + $0x8] sm:$0xff]
    %v71 = vld [vmem:[#allocation6 + $0x10] sm:$0xff]
    %v72 = vld [vmem:[#allocation6 + $0x18] sm:$0xff]
    %v73 = vld [vmem:[#allocation6 + $0x20] sm:$0xff]
    %v74 = vld [vmem:[#allocation6 + $0x28] sm:$0xff]
    %v75 = vld [vmem:[#allocation6 + $0x30] sm:$0x1]
    %v76 = vld [vmem:[%s2] sm:$0x1]
    %v77 = vld [vmem:[#allocation3] sm:$0xf]
    %v78 = vld [vmem:[#allocation3 + $0x4] sm:$0xf]
    %v79 = vunpack.c.l.bf16 %v77
    %v80 = vunpack.c.l.bf16 %v78
    %v81 = vlaneseq
    %v82 = vshrl.u32 %v81, 7
    %v83 = vsub.s32 0, %v82
    %v84 = vrot.slane %v69, %v83
    %v85 = vmul.f32 %v79, %v84
    %v86 = vmul.f32 %v80, %v84
    %s87 = scalar_lea.vmem [#allocation3], 8
    %v88 = vld [vmem:[%s87] sm:$0xf]
    %v89 = vld [vmem:[%s87 + $0x4] sm:$0xf]
    %v90 = vunpack.c.l.bf16 %v88
    %v91 = vunpack.c.l.bf16 %v89
    %v92 = vlaneseq
    %v93 = vshrl.u32 %v92, 7
    %v94 = vsub.s32 1, %v93
    %v95 = vrot.slane %v69, %v94
    %v96 = vmul.f32 %v90, %v95
    %v97 = vmul.f32 %v91, %v95
    %v98 = vadd.f32 %v85, %v96
    %v99 = vadd.f32 %v86, %v97
    %s100 = scalar_lea.vmem [#allocation3], 16
    %v101 = vld [vmem:[%s100] sm:$0xf]
    %v102 = vld [vmem:[%s100 + $0x4] sm:$0xf]
    %v103 = vunpack.c.l.bf16 %v101
    %v104 = vunpack.c.l.bf16 %v102
    %v105 = vlaneseq
    %v106 = vshrl.u32 %v105, 7
    %v107 = vsub.s32 2, %v106
    %v108 = vrot.slane %v69, %v107
    %v109 = vmul.f32 %v103, %v108
    %v110 = vmul.f32 %v104, %v108
    %v111 = vadd.f32 %v98, %v109
    %v112 = vadd.f32 %v99, %v110
    %s113 = scalar_lea.vmem [#allocation3], 24
    %v114 = vld [vmem:[%s113] sm:$0xf]
    %v115 = vld [vmem:[%s113 + $0x4] sm:$0xf]
    %v116 = vunpack.c.l.bf16 %v114
    %v117 = vunpack.c.l.bf16 %v115
    %v118 = vlaneseq
    %v119 = vshrl.u32 %v118, 7
    %v120 = vsub.s32 3, %v119
    %v121 = vrot.slane %v69, %v120
    %v122 = vmul.f32 %v116, %v121
    %v123 = vmul.f32 %v117, %v121
    %v124 = vadd.f32 %v111, %v122
    %v125 = vadd.f32 %v112, %v123
    %s126 = scalar_lea.vmem [#allocation3], 32
    %v127 = vld [vmem:[%s126] sm:$0xf]
    %v128 = vld [vmem:[%s126 + $0x4] sm:$0xf]
    %v129 = vunpack.c.l.bf16 %v127
    %v130 = vunpack.c.l.bf16 %v128
    %v131 = vlaneseq
    %v132 = vshrl.u32 %v131, 7
    %v133 = vsub.s32 4, %v132
    %v134 = vrot.slane %v69, %v133
    %v135 = vmul.f32 %v129, %v134
    %v136 = vmul.f32 %v130, %v134
    %v137 = vadd.f32 %v124, %v135
    %v138 = vadd.f32 %v125, %v136
    %s139 = scalar_lea.vmem [#allocation3], 40
    %v140 = vld [vmem:[%s139] sm:$0xf]
    %v141 = vld [vmem:[%s139 + $0x4] sm:$0xf]
    %v142 = vunpack.c.l.bf16 %v140
    %v143 = vunpack.c.l.bf16 %v141
    %v144 = vlaneseq
    %v145 = vshrl.u32 %v144, 7
    %v146 = vsub.s32 5, %v145
    %v147 = vrot.slane %v69, %v146
    %v148 = vmul.f32 %v142, %v147
    %v149 = vmul.f32 %v143, %v147
    %v150 = vadd.f32 %v137, %v148
    %v151 = vadd.f32 %v138, %v149
    %s152 = scalar_lea.vmem [#allocation3], 48
    %v153 = vld [vmem:[%s152] sm:$0xf]
    %v154 = vld [vmem:[%s152 + $0x4] sm:$0xf]
    %v155 = vunpack.c.l.bf16 %v153
    %v156 = vunpack.c.l.bf16 %v154
    %v157 = vlaneseq
    %v158 = vshrl.u32 %v157, 7
    %v159 = vsub.s32 6, %v158
    %v160 = vrot.slane %v69, %v159
    %v161 = vmul.f32 %v155, %v160
    %v162 = vmul.f32 %v156, %v160
    %v163 = vadd.f32 %v150, %v161
    %v164 = vadd.f32 %v151, %v162
    %s165 = scalar_lea.vmem [#allocation3], 56
    %v166 = vld [vmem:[%s165] sm:$0xf]
    %v167 = vld [vmem:[%s165 + $0x4] sm:$0xf]
    %v168 = vunpack.c.l.bf16 %v166
    %v169 = vunpack.c.l.bf16 %v167
    %v170 = vlaneseq
    %v171 = vshrl.u32 %v170, 7
    %v172 = vsub.s32 7, %v171
    %v173 = vrot.slane %v69, %v172
    %v174 = vmul.f32 %v168, %v173
    %v175 = vmul.f32 %v169, %v173
    %v176 = vadd.f32 %v163, %v174
    %v177 = vadd.f32 %v164, %v175
    %s178 = scalar_lea.vmem [#allocation3], 64
    %v179 = vld [vmem:[%s178] sm:$0xf]
    %v180 = vld [vmem:[%s178 + $0x4] sm:$0xf]
    %v181 = vunpack.c.l.bf16 %v179
    %v182 = vunpack.c.l.bf16 %v180
    %v183 = vlaneseq
    %v184 = vshrl.u32 %v183, 7
    %v185 = vsub.s32 0, %v184
    %v186 = vrot.slane %v70, %v185
    %v187 = vmul.f32 %v181, %v186
    %v188 = vmul.f32 %v182, %v186
    %v189 = vadd.f32 %v176, %v187
    %v190 = vadd.f32 %v177, %v188
    %s191 = scalar_lea.vmem [#allocation3], 72
    %v192 = vld [vmem:[%s191] sm:$0xf]
    %v193 = vld [vmem:[%s191 + $0x4] sm:$0xf]
    %v194 = vunpack.c.l.bf16 %v192
    %v195 = vunpack.c.l.bf16 %v193
    %v196 = vlaneseq
    %v197 = vshrl.u32 %v196, 7
    %v198 = vsub.s32 1, %v197
    %v199 = vrot.slane %v70, %v198
    %v200 = vmul.f32 %v194, %v199
    %v201 = vmul.f32 %v195, %v199
    %v202 = vadd.f32 %v189, %v200
    %v203 = vadd.f32 %v190, %v201
    %s204 = scalar_lea.vmem [#allocation3], 80
    %v205 = vld [vmem:[%s204] sm:$0xf]
    %v206 = vld [vmem:[%s204 + $0x4] sm:$0xf]
    %v207 = vunpack.c.l.bf16 %v205
    %v208 = vunpack.c.l.bf16 %v206
    %v209 = vlaneseq
    %v210 = vshrl.u32 %v209, 7
    %v211 = vsub.s32 2, %v210
    %v212 = vrot.slane %v70, %v211
    %v213 = vmul.f32 %v207, %v212
    %v214 = vmul.f32 %v208, %v212
    %v215 = vadd.f32 %v202, %v213
    %v216 = vadd.f32 %v203, %v214
    %s217 = scalar_lea.vmem [#allocation3], 88
    %v218 = vld [vmem:[%s217] sm:$0xf]
    %v219 = vld [vmem:[%s217 + $0x4] sm:$0xf]
    %v220 = vunpack.c.l.bf16 %v218
    %v221 = vunpack.c.l.bf16 %v219
    %v222 = vlaneseq
    %v223 = vshrl.u32 %v222, 7
    %v224 = vsub.s32 3, %v223
    %v225 = vrot.slane %v70, %v224
    %v226 = vmul.f32 %v220, %v225
    %v227 = vmul.f32 %v221, %v225
    %v228 = vadd.f32 %v215, %v226
    %v229 = vadd.f32 %v216, %v227
    %s230 = scalar_lea.vmem [#allocation3], 96
    %v231 = vld [vmem:[%s230] sm:$0xf]
    %v232 = vld [vmem:[%s230 + $0x4] sm:$0xf]
    %v233 = vunpack.c.l.bf16 %v231
    %v234 = vunpack.c.l.bf16 %v232
    %v235 = vlaneseq
    %v236 = vshrl.u32 %v235, 7
    %v237 = vsub.s32 4, %v236
    %v238 = vrot.slane %v70, %v237
    %v239 = vmul.f32 %v233, %v238
    %v240 = vmul.f32 %v234, %v238
    %v241 = vadd.f32 %v228, %v239
    %v242 = vadd.f32 %v229, %v240
    %s243 = scalar_lea.vmem [#allocation3], 104
    %v244 = vld [vmem:[%s243] sm:$0xf]
    %v245 = vld [vmem:[%s243 + $0x4] sm:$0xf]
    %v246 = vunpack.c.l.bf16 %v244
    %v247 = vunpack.c.l.bf16 %v245
    %v248 = vlaneseq
    %v249 = vshrl.u32 %v248, 7
    %v250 = vsub.s32 5, %v249
    %v251 = vrot.slane %v70, %v250
    %v252 = vmul.f32 %v246, %v251
    %v253 = vmul.f32 %v247, %v251
    %v254 = vadd.f32 %v241, %v252
    %v255 = vadd.f32 %v242, %v253
    %s256 = scalar_lea.vmem [#allocation3], 112
    %v257 = vld [vmem:[%s256] sm:$0xf]
    %v258 = vld [vmem:[%s256 + $0x4] sm:$0xf]
    %v259 = vunpack.c.l.bf16 %v257
    %v260 = vunpack.c.l.bf16 %v258
    %v261 = vlaneseq
    %v262 = vshrl.u32 %v261, 7
    %v263 = vsub.s32 6, %v262
    %v264 = vrot.slane %v70, %v263
    %v265 = vmul.f32 %v259, %v264
    %v266 = vmul.f32 %v260, %v264
    %v267 = vadd.f32 %v254, %v265
    %v268 = vadd.f32 %v255, %v266
    %s269 = scalar_lea.vmem [#allocation3], 120
    %v270 = vld [vmem:[%s269] sm:$0xf]
    %v271 = vld [vmem:[%s269 + $0x4] sm:$0xf]
    %v272 = vunpack.c.l.bf16 %v270
    %v273 = vunpack.c.l.bf16 %v271
    %v274 = vlaneseq
    %v275 = vshrl.u32 %v274, 7
    %v276 = vsub.s32 7, %v275
    %v277 = vrot.slane %v70, %v276
    %v278 = vmul.f32 %v272, %v277
    %v279 = vmul.f32 %v273, %v277
    %v280 = vadd.f32 %v267, %v278
    %v281 = vadd.f32 %v268, %v279
    %s282 = scalar_lea.vmem [#allocation3], 128
    %v283 = vld [vmem:[%s282] sm:$0xf]
    %v284 = vld [vmem:[%s282 + $0x4] sm:$0xf]
    %v285 = vunpack.c.l.bf16 %v283
    %v286 = vunpack.c.l.bf16 %v284
    %v287 = vlaneseq
    %v288 = vshrl.u32 %v287, 7
    %v289 = vsub.s32 0, %v288
    %v290 = vrot.slane %v71, %v289
    %v291 = vmul.f32 %v285, %v290
    %v292 = vmul.f32 %v286, %v290
    %v293 = vadd.f32 %v280, %v291
    %v294 = vadd.f32 %v281, %v292
    %s295 = scalar_lea.vmem [#allocation3], 136
    %v296 = vld [vmem:[%s295] sm:$0xf]
    %v297 = vld [vmem:[%s295 + $0x4] sm:$0xf]
    %v298 = vunpack.c.l.bf16 %v296
    %v299 = vunpack.c.l.bf16 %v297
    %v300 = vlaneseq
    %v301 = vshrl.u32 %v300, 7
    %v302 = vsub.s32 1, %v301
    %v303 = vrot.slane %v71, %v302
    %v304 = vmul.f32 %v298, %v303
    %v305 = vmul.f32 %v299, %v303
    %v306 = vadd.f32 %v293, %v304
    %v307 = vadd.f32 %v294, %v305
    %s308 = scalar_lea.vmem [#allocation3], 144
    %v309 = vld [vmem:[%s308] sm:$0xf]
    %v310 = vld [vmem:[%s308 + $0x4] sm:$0xf]
    %v311 = vunpack.c.l.bf16 %v309
    %v312 = vunpack.c.l.bf16 %v310
    %v313 = vlaneseq
    %v314 = vshrl.u32 %v313, 7
    %v315 = vsub.s32 2, %v314
    %v316 = vrot.slane %v71, %v315
    %v317 = vmul.f32 %v311, %v316
    %v318 = vmul.f32 %v312, %v316
    %v319 = vadd.f32 %v306, %v317
    %v320 = vadd.f32 %v307, %v318
    %s321 = scalar_lea.vmem [#allocation3], 152
    %v322 = vld [vmem:[%s321] sm:$0xf]
    %v323 = vld [vmem:[%s321 + $0x4] sm:$0xf]
    %v324 = vunpack.c.l.bf16 %v322
    %v325 = vunpack.c.l.bf16 %v323
    %v326 = vlaneseq
    %v327 = vshrl.u32 %v326, 7
    %v328 = vsub.s32 3, %v327
    %v329 = vrot.slane %v71, %v328
    %v330 = vmul.f32 %v324, %v329
    %v331 = vmul.f32 %v325, %v329
    %v332 = vadd.f32 %v319, %v330
    %v333 = vadd.f32 %v320, %v331
    %s334 = scalar_lea.vmem [#allocation3], 160
    %v335 = vld [vmem:[%s334] sm:$0xf]
    %v336 = vld [vmem:[%s334 + $0x4] sm:$0xf]
    %v337 = vunpack.c.l.bf16 %v335
    %v338 = vunpack.c.l.bf16 %v336
    %v339 = vlaneseq
    %v340 = vshrl.u32 %v339, 7
    %v341 = vsub.s32 4, %v340
    %v342 = vrot.slane %v71, %v341
    %v343 = vmul.f32 %v337, %v342
    %v344 = vmul.f32 %v338, %v342
    %v345 = vadd.f32 %v332, %v343
    %v346 = vadd.f32 %v333, %v344
    %s347 = scalar_lea.vmem [#allocation3], 168
    %v348 = vld [vmem:[%s347] sm:$0xf]
    %v349 = vld [vmem:[%s347 + $0x4] sm:$0xf]
    %v350 = vunpack.c.l.bf16 %v348
    %v351 = vunpack.c.l.bf16 %v349
    %v352 = vlaneseq
    %v353 = vshrl.u32 %v352, 7
    %v354 = vsub.s32 5, %v353
    %v355 = vrot.slane %v71, %v354
    %v356 = vmul.f32 %v350, %v355
    %v357 = vmul.f32 %v351, %v355
    %v358 = vadd.f32 %v345, %v356
    %v359 = vadd.f32 %v346, %v357
    %s360 = scalar_lea.vmem [#allocation3], 176
    %v361 = vld [vmem:[%s360] sm:$0xf]
    %v362 = vld [vmem:[%s360 + $0x4] sm:$0xf]
    %v363 = vunpack.c.l.bf16 %v361
    %v364 = vunpack.c.l.bf16 %v362
    %v365 = vlaneseq
    %v366 = vshrl.u32 %v365, 7
    %v367 = vsub.s32 6, %v366
    %v368 = vrot.slane %v71, %v367
    %v369 = vmul.f32 %v363, %v368
    %v370 = vmul.f32 %v364, %v368
    %v371 = vadd.f32 %v358, %v369
    %v372 = vadd.f32 %v359, %v370
    %s373 = scalar_lea.vmem [#allocation3], 184
    %v374 = vld [vmem:[%s373] sm:$0xf]
    %v375 = vld [vmem:[%s373 + $0x4] sm:$0xf]
    %v376 = vunpack.c.l.bf16 %v374
    %v377 = vunpack.c.l.bf16 %v375
    %v378 = vlaneseq
    %v379 = vshrl.u32 %v378, 7
    %v380 = vsub.s32 7, %v379
    %v381 = vrot.slane %v71, %v380
    %v382 = vmul.f32 %v376, %v381
    %v383 = vmul.f32 %v377, %v381
    %v384 = vadd.f32 %v371, %v382
    %v385 = vadd.f32 %v372, %v383
    %s386 = scalar_lea.vmem [#allocation3], 192
    %v387 = vld [vmem:[%s386] sm:$0xf]
    %v388 = vld [vmem:[%s386 + $0x4] sm:$0xf]
    %v389 = vunpack.c.l.bf16 %v387
    %v390 = vunpack.c.l.bf16 %v388
    %v391 = vlaneseq
    %v392 = vshrl.u32 %v391, 7
    %v393 = vsub.s32 0, %v392
    %v394 = vrot.slane %v72, %v393
    %v395 = vmul.f32 %v389, %v394
    %v396 = vmul.f32 %v390, %v394
    %v397 = vadd.f32 %v384, %v395
    %v398 = vadd.f32 %v385, %v396
    %s399 = scalar_lea.vmem [#allocation3], 200
    %v400 = vld [vmem:[%s399] sm:$0xf]
    %v401 = vld [vmem:[%s399 + $0x4] sm:$0xf]
    %v402 = vunpack.c.l.bf16 %v400
    %v403 = vunpack.c.l.bf16 %v401
    %v404 = vlaneseq
    %v405 = vshrl.u32 %v404, 7
    %v406 = vsub.s32 1, %v405
    %v407 = vrot.slane %v72, %v406
    %v408 = vmul.f32 %v402, %v407
    %v409 = vmul.f32 %v403, %v407
    %v410 = vadd.f32 %v397, %v408
    %v411 = vadd.f32 %v398, %v409
    %s412 = scalar_lea.vmem [#allocation3], 208
    %v413 = vld [vmem:[%s412] sm:$0xf]
    %v414 = vld [vmem:[%s412 + $0x4] sm:$0xf]
    %v415 = vunpack.c.l.bf16 %v413
    %v416 = vunpack.c.l.bf16 %v414
    %v417 = vlaneseq
    %v418 = vshrl.u32 %v417, 7
    %v419 = vsub.s32 2, %v418
    %v420 = vrot.slane %v72, %v419
    %v421 = vmul.f32 %v415, %v420
    %v422 = vmul.f32 %v416, %v420
    %v423 = vadd.f32 %v410, %v421
    %v424 = vadd.f32 %v411, %v422
    %s425 = scalar_lea.vmem [#allocation3], 216
    %v426 = vld [vmem:[%s425] sm:$0xf]
    %v427 = vld [vmem:[%s425 + $0x4] sm:$0xf]
    %v428 = vunpack.c.l.bf16 %v426
    %v429 = vunpack.c.l.bf16 %v427
    %v430 = vlaneseq
    %v431 = vshrl.u32 %v430, 7
    %v432 = vsub.s32 3, %v431
    %v433 = vrot.slane %v72, %v432
    %v434 = vmul.f32 %v428, %v433
    %v435 = vmul.f32 %v429, %v433
    %v436 = vadd.f32 %v423, %v434
    %v437 = vadd.f32 %v424, %v435
    %s438 = scalar_lea.vmem [#allocation3], 224
    %v439 = vld [vmem:[%s438] sm:$0xf]
    %v440 = vld [vmem:[%s438 + $0x4] sm:$0xf]
    %v441 = vunpack.c.l.bf16 %v439
    %v442 = vunpack.c.l.bf16 %v440
    %v443 = vlaneseq
    %v444 = vshrl.u32 %v443, 7
    %v445 = vsub.s32 4, %v444
    %v446 = vrot.slane %v72, %v445
    %v447 = vmul.f32 %v441, %v446
    %v448 = vmul.f32 %v442, %v446
    %v449 = vadd.f32 %v436, %v447
    %v450 = vadd.f32 %v437, %v448
    %s451 = scalar_lea.vmem [#allocation3], 232
    %v452 = vld [vmem:[%s451] sm:$0xf]
    %v453 = vld [vmem:[%s451 + $0x4] sm:$0xf]
    %v454 = vunpack.c.l.bf16 %v452
    %v455 = vunpack.c.l.bf16 %v453
    %v456 = vlaneseq
    %v457 = vshrl.u32 %v456, 7
    %v458 = vsub.s32 5, %v457
    %v459 = vrot.slane %v72, %v458
    %v460 = vmul.f32 %v454, %v459
    %v461 = vmul.f32 %v455, %v459
    %v462 = vadd.f32 %v449, %v460
    %v463 = vadd.f32 %v450, %v461
    %s464 = scalar_lea.vmem [#allocation3], 240
    %v465 = vld [vmem:[%s464] sm:$0xf]
    %v466 = vld [vmem:[%s464 + $0x4] sm:$0xf]
    %v467 = vunpack.c.l.bf16 %v465
    %v468 = vunpack.c.l.bf16 %v466
    %v469 = vlaneseq
    %v470 = vshrl.u32 %v469, 7
    %v471 = vsub.s32 6, %v470
    %v472 = vrot.slane %v72, %v471
    %v473 = vmul.f32 %v467, %v472
    %v474 = vmul.f32 %v468, %v472
    %v475 = vadd.f32 %v462, %v473
    %v476 = vadd.f32 %v463, %v474
    %s477 = scalar_lea.vmem [#allocation3], 248
    %v478 = vld [vmem:[%s477] sm:$0xf]
    %v479 = vld [vmem:[%s477 + $0x4] sm:$0xf]
    %v480 = vunpack.c.l.bf16 %v478
    %v481 = vunpack.c.l.bf16 %v479
    %v482 = vlaneseq
    %v483 = vshrl.u32 %v482, 7
    %v484 = vsub.s32 7, %v483
    %v485 = vrot.slane %v72, %v484
    %v486 = vmul.f32 %v480, %v485
    %v487 = vmul.f32 %v481, %v485
    %v488 = vadd.f32 %v475, %v486
    %v489 = vadd.f32 %v476, %v487
    %s490 = scalar_lea.vmem [#allocation3], 256
    %v491 = vld [vmem:[%s490] sm:$0xf]
    %v492 = vld [vmem:[%s490 + $0x4] sm:$0xf]
    %v493 = vunpack.c.l.bf16 %v491
    %v494 = vunpack.c.l.bf16 %v492
    %v495 = vlaneseq
    %v496 = vshrl.u32 %v495, 7
    %v497 = vsub.s32 0, %v496
    %v498 = vrot.slane %v73, %v497
    %v499 = vmul.f32 %v493, %v498
    %v500 = vmul.f32 %v494, %v498
    %v501 = vadd.f32 %v488, %v499
    %v502 = vadd.f32 %v489, %v500
    %s503 = scalar_lea.vmem [#allocation3], 264
    %v504 = vld [vmem:[%s503] sm:$0xf]
    %v505 = vld [vmem:[%s503 + $0x4] sm:$0xf]
    %v506 = vunpack.c.l.bf16 %v504
    %v507 = vunpack.c.l.bf16 %v505
    %v508 = vlaneseq
    %v509 = vshrl.u32 %v508, 7
    %v510 = vsub.s32 1, %v509
    %v511 = vrot.slane %v73, %v510
    %v512 = vmul.f32 %v506, %v511
    %v513 = vmul.f32 %v507, %v511
    %v514 = vadd.f32 %v501, %v512
    %v515 = vadd.f32 %v502, %v513
    %s516 = scalar_lea.vmem [#allocation3], 272
    %v517 = vld [vmem:[%s516] sm:$0xf]
    %v518 = vld [vmem:[%s516 + $0x4] sm:$0xf]
    %v519 = vunpack.c.l.bf16 %v517
    %v520 = vunpack.c.l.bf16 %v518
    %v521 = vlaneseq
    %v522 = vshrl.u32 %v521, 7
    %v523 = vsub.s32 2, %v522
    %v524 = vrot.slane %v73, %v523
    %v525 = vmul.f32 %v519, %v524
    %v526 = vmul.f32 %v520, %v524
    %v527 = vadd.f32 %v514, %v525
    %v528 = vadd.f32 %v515, %v526
    %s529 = scalar_lea.vmem [#allocation3], 280
    %v530 = vld [vmem:[%s529] sm:$0xf]
    %v531 = vld [vmem:[%s529 + $0x4] sm:$0xf]
    %v532 = vunpack.c.l.bf16 %v530
    %v533 = vunpack.c.l.bf16 %v531
    %v534 = vlaneseq
    %v535 = vshrl.u32 %v534, 7
    %v536 = vsub.s32 3, %v535
    %v537 = vrot.slane %v73, %v536
    %v538 = vmul.f32 %v532, %v537
    %v539 = vmul.f32 %v533, %v537
    %v540 = vadd.f32 %v527, %v538
    %v541 = vadd.f32 %v528, %v539
    %s542 = scalar_lea.vmem [#allocation3], 288
    %v543 = vld [vmem:[%s542] sm:$0xf]
    %v544 = vld [vmem:[%s542 + $0x4] sm:$0xf]
    %v545 = vunpack.c.l.bf16 %v543
    %v546 = vunpack.c.l.bf16 %v544
    %v547 = vlaneseq
    %v548 = vshrl.u32 %v547, 7
    %v549 = vsub.s32 4, %v548
    %v550 = vrot.slane %v73, %v549
    %v551 = vmul.f32 %v545, %v550
    %v552 = vmul.f32 %v546, %v550
    %v553 = vadd.f32 %v540, %v551
    %v554 = vadd.f32 %v541, %v552
    %s555 = scalar_lea.vmem [#allocation3], 296
    %v556 = vld [vmem:[%s555] sm:$0xf]
    %v557 = vld [vmem:[%s555 + $0x4] sm:$0xf]
    %v558 = vunpack.c.l.bf16 %v556
    %v559 = vunpack.c.l.bf16 %v557
    %v560 = vlaneseq
    %v561 = vshrl.u32 %v560, 7
    %v562 = vsub.s32 5, %v561
    %v563 = vrot.slane %v73, %v562
    %v564 = vmul.f32 %v558, %v563
    %v565 = vmul.f32 %v559, %v563
    %v566 = vadd.f32 %v553, %v564
    %v567 = vadd.f32 %v554, %v565
    %s568 = scalar_lea.vmem [#allocation3], 304
    %v569 = vld [vmem:[%s568] sm:$0xf]
    %v570 = vld [vmem:[%s568 + $0x4] sm:$0xf]
    %v571 = vunpack.c.l.bf16 %v569
    %v572 = vunpack.c.l.bf16 %v570
    %v573 = vlaneseq
    %v574 = vshrl.u32 %v573, 7
    %v575 = vsub.s32 6, %v574
    %v576 = vrot.slane %v73, %v575
    %v577 = vmul.f32 %v571, %v576
    %v578 = vmul.f32 %v572, %v576
    %v579 = vadd.f32 %v566, %v577
    %v580 = vadd.f32 %v567, %v578
    %s581 = scalar_lea.vmem [#allocation3], 312
    %v582 = vld [vmem:[%s581] sm:$0xf]
    %v583 = vld [vmem:[%s581 + $0x4] sm:$0xf]
    %v584 = vunpack.c.l.bf16 %v582
    %v585 = vunpack.c.l.bf16 %v583
    %v586 = vlaneseq
    %v587 = vshrl.u32 %v586, 7
    %v588 = vsub.s32 7, %v587
    %v589 = vrot.slane %v73, %v588
    %v590 = vmul.f32 %v584, %v589
    %v591 = vmul.f32 %v585, %v589
    %v592 = vadd.f32 %v579, %v590
    %v593 = vadd.f32 %v580, %v591
    %s594 = scalar_lea.vmem [#allocation3], 320
    %v595 = vld [vmem:[%s594] sm:$0xf]
    %v596 = vld [vmem:[%s594 + $0x4] sm:$0xf]
    %v597 = vunpack.c.l.bf16 %v595
    %v598 = vunpack.c.l.bf16 %v596
    %v599 = vlaneseq
    %v600 = vshrl.u32 %v599, 7
    %v601 = vsub.s32 0, %v600
    %v602 = vrot.slane %v74, %v601
    %v603 = vmul.f32 %v597, %v602
    %v604 = vmul.f32 %v598, %v602
    %v605 = vadd.f32 %v592, %v603
    %v606 = vadd.f32 %v593, %v604
    %s607 = scalar_lea.vmem [#allocation3], 328
    %v608 = vld [vmem:[%s607] sm:$0xf]
    %v609 = vld [vmem:[%s607 + $0x4] sm:$0xf]
    %v610 = vunpack.c.l.bf16 %v608
    %v611 = vunpack.c.l.bf16 %v609
    %v612 = vlaneseq
    %v613 = vshrl.u32 %v612, 7
    %v614 = vsub.s32 1, %v613
    %v615 = vrot.slane %v74, %v614
    %v616 = vmul.f32 %v610, %v615
    %v617 = vmul.f32 %v611, %v615
    %v618 = vadd.f32 %v605, %v616
    %v619 = vadd.f32 %v606, %v617
    %s620 = scalar_lea.vmem [#allocation3], 336
    %v621 = vld [vmem:[%s620] sm:$0xf]
    %v622 = vld [vmem:[%s620 + $0x4] sm:$0xf]
    %v623 = vunpack.c.l.bf16 %v621
    %v624 = vunpack.c.l.bf16 %v622
    %v625 = vlaneseq
    %v626 = vshrl.u32 %v625, 7
    %v627 = vsub.s32 2, %v626
    %v628 = vrot.slane %v74, %v627
    %v629 = vmul.f32 %v623, %v628
    %v630 = vmul.f32 %v624, %v628
    %v631 = vadd.f32 %v618, %v629
    %v632 = vadd.f32 %v619, %v630
    %s633 = scalar_lea.vmem [#allocation3], 344
    %v634 = vld [vmem:[%s633] sm:$0xf]
    %v635 = vld [vmem:[%s633 + $0x4] sm:$0xf]
    %v636 = vunpack.c.l.bf16 %v634
    %v637 = vunpack.c.l.bf16 %v635
    %v638 = vlaneseq
    %v639 = vshrl.u32 %v638, 7
    %v640 = vsub.s32 3, %v639
    %v641 = vrot.slane %v74, %v640
    %v642 = vmul.f32 %v636, %v641
    %v643 = vmul.f32 %v637, %v641
    %v644 = vadd.f32 %v631, %v642
    %v645 = vadd.f32 %v632, %v643
    %s646 = scalar_lea.vmem [#allocation3], 352
    %v647 = vld [vmem:[%s646] sm:$0xf]
    %v648 = vld [vmem:[%s646 + $0x4] sm:$0xf]
    %v649 = vunpack.c.l.bf16 %v647
    %v650 = vunpack.c.l.bf16 %v648
    %v651 = vlaneseq
    %v652 = vshrl.u32 %v651, 7
    %v653 = vsub.s32 4, %v652
    %v654 = vrot.slane %v74, %v653
    %v655 = vmul.f32 %v649, %v654
    %v656 = vmul.f32 %v650, %v654
    %v657 = vadd.f32 %v644, %v655
    %v658 = vadd.f32 %v645, %v656
    %s659 = scalar_lea.vmem [#allocation3], 360
    %v660 = vld [vmem:[%s659] sm:$0xf]
    %v661 = vld [vmem:[%s659 + $0x4] sm:$0xf]
    %v662 = vunpack.c.l.bf16 %v660
    %v663 = vunpack.c.l.bf16 %v661
    %v664 = vlaneseq
    %v665 = vshrl.u32 %v664, 7
    %v666 = vsub.s32 5, %v665
    %v667 = vrot.slane %v74, %v666
    %v668 = vmul.f32 %v662, %v667
    %v669 = vmul.f32 %v663, %v667
    %v670 = vadd.f32 %v657, %v668
    %v671 = vadd.f32 %v658, %v669
    %s672 = scalar_lea.vmem [#allocation3], 368
    %v673 = vld [vmem:[%s672] sm:$0xf]
    %v674 = vld [vmem:[%s672 + $0x4] sm:$0xf]
    %v675 = vunpack.c.l.bf16 %v673
    %v676 = vunpack.c.l.bf16 %v674
    %v677 = vlaneseq
    %v678 = vshrl.u32 %v677, 7
    %v679 = vsub.s32 6, %v678
    %v680 = vrot.slane %v74, %v679
    %v681 = vmul.f32 %v675, %v680
    %v682 = vmul.f32 %v676, %v680
    %v683 = vadd.f32 %v670, %v681
    %v684 = vadd.f32 %v671, %v682
    %s685 = scalar_lea.vmem [#allocation3], 376
    %v686 = vld [vmem:[%s685] sm:$0xf]
    %v687 = vld [vmem:[%s685 + $0x4] sm:$0xf]
    %v688 = vunpack.c.l.bf16 %v686
    %v689 = vunpack.c.l.bf16 %v687
    %v690 = vlaneseq
    %v691 = vshrl.u32 %v690, 7
    %v692 = vsub.s32 7, %v691
    %v693 = vrot.slane %v74, %v692
    %v694 = vmul.f32 %v688, %v693
    %v695 = vmul.f32 %v689, %v693
    %v696 = vadd.f32 %v683, %v694
    %v697 = vadd.f32 %v684, %v695
    %s698 = scalar_lea.vmem [#allocation3], 384
    %v699 = vld [vmem:[%s698] sm:$0xf]
    %v700 = vld [vmem:[%s698 + $0x4] sm:$0xf]
    %v701 = vunpack.c.l.bf16 %v699
    %v702 = vunpack.c.l.bf16 %v700
    %v703 = vlaneseq
    %v704 = vshrl.u32 %v703, 7
    %v705 = vsub.s32 0, %v704
    %v706 = vrot.slane %v75, %v705
    %v707 = vmul.f32 %v701, %v706
    %v708 = vmul.f32 %v702, %v706
    %v709 = vadd.f32 %v696, %v707
    %v710 = vadd.f32 %v697, %v708
    %v712 = vlaneseq
    %v713 = vshrl.u32 %v712, 7
    %v714 = vsub.s32 0, %v713
    %v715 = vrot.slane %v76, %v714
    %v717 = vadd.f32 %v709, %v715
    %v718 = vadd.f32 %v710, %v715
    %v719 = vmax.f32 %v717, 0.0
    %v720 = vmax.f32 %v718, 0.0
    %v721 = vld [vmem:[#allocation2] sm:$0xff]
    %v722 = vld [vmem:[#allocation2 + $0x8] sm:$0xff]
    %v723 = vpack.c.bf16 %v720, %v719
    %v724 = vld [vmem:[#allocation8] sm:$0xf]
    %v725 = vld [vmem:[#allocation8 + $0x4] sm:$0xf]
    %v726 = vld [vmem:[#allocation8 + $0x8] sm:$0xf]
    %v727 = vld [vmem:[#allocation8 + $0xc] sm:$0xf]
    %v728 = vld [vmem:[#allocation8 + $0x10] sm:$0xf]
    %v729 = vld [vmem:[#allocation8 + $0x14] sm:$0xf]
    %v730 = vld [vmem:[#allocation8 + $0x18] sm:$0xf]
    %v731 = vld [vmem:[#allocation8 + $0x1c] sm:$0xf]
    %v732 = vld [vmem:[#allocation8 + $0x20] sm:$0xf]
    %v733 = vld [vmem:[#allocation8 + $0x24] sm:$0xf]
    %v734 = vld [vmem:[#allocation8 + $0x28] sm:$0xf]
    %v735 = vld [vmem:[#allocation8 + $0x2c] sm:$0xf]
    %v736 = vld [vmem:[#allocation8 + $0x30] sm:$0xf]
    %v737 = vld [vmem:[#allocation8 + $0x34] sm:$0xf]
    %v738 = vld [vmem:[#allocation8 + $0x38] sm:$0xf]
    %v739 = vld [vmem:[#allocation8 + $0x3c] sm:$0xf]
    %v756 = vunpack.c.l.b16 %v724
    %v757 = vunpack.c.l.b16 %v725
    %v758 = vunpack.c.l.b16 %v726
    %v759 = vunpack.c.l.b16 %v727
    %v760 = vunpack.c.l.b16 %v728
    %v761 = vunpack.c.l.b16 %v729
    %v762 = vunpack.c.l.b16 %v730
    %v763 = vunpack.c.l.b16 %v731
    %v764 = vunpack.c.l.b16 %v732
    %v765 = vunpack.c.l.b16 %v733
    %v766 = vunpack.c.l.b16 %v734
    %v767 = vunpack.c.l.b16 %v735
    %v768 = vunpack.c.l.b16 %v736
    %v769 = vunpack.c.l.b16 %v737
    %v770 = vunpack.c.l.b16 %v738
    %v771 = vunpack.c.l.b16 %v739
    %v772 = vpack.c.b16 %v757, %v756
    %v773 = vpack.c.b16 %v759, %v758
    %v774 = vpack.c.b16 %v761, %v760
    %v775 = vpack.c.b16 %v763, %v762
    %v776 = vpack.c.b16 %v765, %v764
    %v777 = vpack.c.b16 %v767, %v766
    %v778 = vpack.c.b16 %v769, %v768
    %v779 = vpack.c.b16 %v771, %v770
    %788 = vmatprep.subr.bf16.mxu0 0
    %789 = vmatpush1.bf16.msra.mxu0 %v772
    %790 = vmatprep.subr.bf16.mxu0 0
    %791 = vmatpush1.bf16.msra.mxu0 %v773
    %792 = vmatprep.subr.bf16.mxu0 0
    %793 = vmatpush1.bf16.msra.mxu0 %v774
    %794 = vmatprep.subr.bf16.mxu0 0
    %795 = vmatpush1.bf16.msra.mxu0 %v775
    %796 = vmatprep.subr.bf16.mxu0 0
    %797 = vmatpush1.bf16.msra.mxu0 %v776
    %798 = vmatprep.subr.bf16.mxu0 0
    %799 = vmatpush1.bf16.msra.mxu0 %v777
    %800 = vmatprep.subr.bf16.mxu0 0
    %801 = vmatpush1.bf16.msra.mxu0 %v778
    %802 = vmatprep.subr.bf16.mxu0 0
    %803 = vmatpush1.bf16.msra.mxu0 %v779
    %804 = vmatprep.subr.bf16.mxu0 0
    %805 = vmatpush1.bf16.msra.mxu0 0
    %806 = vmatprep.subr.bf16.mxu0 0
    %807 = vmatpush1.bf16.msra.mxu0 0
    %808 = vmatprep.subr.bf16.mxu0 0
    %809 = vmatpush1.bf16.msra.mxu0 0
    %810 = vmatprep.subr.bf16.mxu0 0
    %811 = vmatpush1.bf16.msra.mxu0 0
    %812 = vmatprep.subr.bf16.mxu0 0
    %813 = vmatpush1.bf16.msra.mxu0 0
    %814 = vmatprep.subr.bf16.mxu0 0
    %815 = vmatpush1.bf16.msra.mxu0 0
    %816 = vmatprep.subr.bf16.mxu0 0
    %817 = vmatpush1.bf16.msra.mxu0 0
    %818 = vmatprep.subr.bf16.mxu0 0
    %819 = vmatpush1.bf16.msra.mxu0 0
    %820 = vmatprep.mubr.bf16.mxu0 0
    %821 = vmatmul.mubr.bf16.gmra.mrb[0].mxu0 %v723
    %v822 = vpop.f32.mrb[0].mxu0
    %v823 = vadd.f32 0.0, %v822
    %v824 = vpop.f32.mrb[0].mxu0
    %v825 = vpop.f32.mrb[0].mxu0
    %v826 = vadd.f32 0.0, %v825
    %v827 = vpop.f32.mrb[0].mxu0
    %828 = vdwg.mxu0
    %v829 = vadd.f32 %v721, %v823
    %v830 = vadd.f32 %v722, %v826
    %831 = vst [vmem:[#allocation2] sm:$0xff] %v829
    %832 = vst [vmem:[#allocation2 + $0x8] sm:$0xff] %v830
    // Predicated region
    $region38: #{tpu_custom_call.1} parent=1 // pred_check
      %p833 = pneg %p63
    $region39: #{tpu_custom_call.1} parent=1 // pred_check_branch
      %835 = sbr.rel (%p833) target = $region41
    $region40: #{tpu_custom_call.1} parent=1 // pred_region
      %v836 = vld [vmem:[#allocation2] sm:$0xff]
      %v837 = vld [vmem:[#allocation2 + $0x8] sm:$0xff]
      %v838 = vld [vmem:[%s4] sm:$0x1]
      %v840 = vlaneseq
      %v841 = vshrl.u32 %v840, 7
      %v842 = vsub.s32 0, %v841
      %v843 = vrot.slane %v838, %v842
      %v845 = vadd.f32 %v836, %v843
      %v846 = vadd.f32 %v837, %v843
      %v847 = vmax.f32 %v845, 0.0
      %v848 = vmax.f32 %v846, 0.0
      %849 = vst [vmem:[#allocation9] sm:$0xff] %v847
      %850 = vst [vmem:[#allocation9 + $0x8] sm:$0xff] %v848
    $region41: #{tpu_custom_call.1} parent=1 // pred_fallthru
      _
    // Predicated region
    $region42: #{tpu_custom_call.1} parent=1 // pred_check
      _
    $region43: #{tpu_custom_call.1} parent=1 // pred_check_branch
      %852 = sbr.rel (0) target = $region45
    $region44: #{tpu_custom_call.1} parent=1 // pred_region
      %s854 = ssub.s32 256, 256
      %855 = vsyncadd [#allocation5], %s854
      %s856 = sshll.u32 [#allocation9], 4
      %s857 = int_to_ptr.vmem [resolvable:$true] %s856
      %862 = dma.vmem_to_hbm [thread:$0]  %s857, 256, %s5, [#allocation5], 128, 128, 8
    $region45: #{tpu_custom_call.1} parent=1 // pred_fallthru
      _
    // Predicated region
    $region46: #{tpu_custom_call.1} parent=1 // pred_check
      _
    $region47: #{tpu_custom_call.1} parent=1 // pred_check_branch
      %864 = sbr.rel (0) target = $region49
    $region48: #{tpu_custom_call.1} parent=1 // pred_region
      %865 = dma.done [#allocation5], 256
    $region49: #{tpu_custom_call.1} parent=1 // pred_fallthru
      _
    %866 = vsyncpa [#allocation4], 1
    %867 = vsyncpa [#allocation7], 1
    %868 = vsyncpa [#allocation5], 1

</llo_original>
